<compile_context>
chip_gen: v5e
topology: v5e:2x2
jax: 0.10.0
libtpu: 0.0.40
codegen_flags: <defaults>
</compile_context>

<pallas_src>
import re

import jax
import jax.numpy as jnp
from jax import lax
from jax.experimental import pallas as pl
from jax.experimental.pallas import tpu as pltpu

_EPS = 1e-5
_SQRT_2_OVER_PI = 0.7978845608028654


# ------------------------------ hardware queries --------------------------------

def _chip_gen():
    """TPU generation (4, 5, 6, 7, ...) parsed from device_kind."""
    try:
        kind = jax.devices()[0].device_kind
        m = re.search(r"(\d+)", kind)
        if m:
            return int(m.group(1))
    except Exception:
        pass
    return 5          # conservative default: all-f32 VPU maths


def _vmem_capacity_bytes(gen):
    try:
        return int(pltpu.get_tpu_info().vmem_capacity_bytes)
    except Exception:
        return (64 << 20) if gen >= 7 else (128 << 20)


# ------------------------------- small helpers -----------------------------------

def _largest_divisor_leq(n, cap):
    cap = max(1, min(n, cap))
    for d in range(cap, 0, -1):
        if n % d == 0:
            return d
    return 1


def _gelu_tanh(x):
    # tanh-approximate GELU: the transcendental goes to the (otherwise idle)
    # EUP slot.  Max deviation from PyTorch's exact erf GELU is ~3e-4.
    return 0.5 * x * (1.0 + jnp.tanh(_SQRT_2_OVER_PI * (x + 0.044715 * x * x * x)))


def _roll(x, shift, axis):
    """Circular roll, jnp.roll convention (positive shift -> higher indices)."""
    n = x.shape[axis]
    s = shift % n
    if s == 0:
        return x
    return pltpu.roll(x, s, axis=axis)


def _channel_reduce_tiled(s, W, C):
    """Sum rows of shape (r, W*C) over their W channel groups.  The result is
    the per-channel total already replicated ("pre-tiled") at every w."""
    if W == 1:
        return s
    if W & (W - 1) == 0:                     # power of two: log2(W) roll-adds
        acc, shift = s, C
        while shift < W * C:
            acc = acc + _roll(acc, shift, axis=1)
            shift *= 2
        return acc
    acc = s                                  # generic W: W-1 roll-adds
    for k in range(1, W):
        acc = acc + _roll(s, k * C, axis=1)
    return acc


def _norm_coeffs(x, gamma_row, beta_row, W, C, stack_stats):
    """Instance-norm statistics + conditional affine on the fused (H, W*C)
    layout.  Shifted single pass: a per-channel anchor (channel mean of row 0)
    is subtracted before accumulating sum / sum-of-squares, which removes the
    catastrophic-cancellation risk of plain E[x^2]-E[x]^2 while still touching
    x only once.  With stack_stats the two sums share one roll ladder.

    Returns (scale, shift), each (1, W*C) f32: normalized = x * scale + shift.
    """
    inv_n = 1.0 / float(x.shape[0] * W)
    anchor = _channel_reduce_tiled(x[0:1, :], W, C) * (1.0 / W)       # (1, WC)
    d = x - anchor
    s1 = jnp.sum(d, axis=0, keepdims=True)
    s2 = jnp.sum(d * d, axis=0, keepdims=True)
    if stack_stats:
        stats = _channel_reduce_tiled(jnp.concatenate([s1, s2], axis=0), W, C)
        s1, s2 = stats[0:1], stats[1:2]
    else:
        s1 = _channel_reduce_tiled(s1, W, C)
        s2 = _channel_reduce_tiled(s2, W, C)
    m_sh = s1 * inv_n
    var = jnp.maximum(s2 * inv_n - m_sh * m_sh, 0.0)
    scale = gamma_row * lax.rsqrt(var + _EPS)
    shift = beta_row - (anchor + m_sh) * scale
    return scale, shift


def _dwconv3x3(h, dw_c, W, C):
    """Depthwise 3x3 conv with circular padding on the fused (H, W*C) layout:
    wrap-pad + shift == circular roll (+-1 on H / sublanes, +-C on the fused
    lane axis).  dw_c: (10, W*C) = 9 pre-tiled taps + bias."""
    acc = None
    for kh in range(3):
        hh = _roll(h, 1 - kh, axis=0)
        for kw in range(3):
            term = _roll(hh, (1 - kw) * C, axis=1) * dw_c[kh * 3 + kw]
            acc = term if acc is None else acc + term
    return acc + dw_c[9]


# ------------------------------------ kernel -------------------------------------

def _make_kernel(H, W, C, hb, Bblk, use_kron, stack_stats, cdt):
    WC = W * C
    n_chunks = H // hb
    f32 = jnp.float32

    def kernel(x_ref, cond_ref, dw_ref, w1_ref, w2_ref, pwb_ref, o_ref):
        # Grid-invariant operands: read / cast once per grid step.
        dw_c = dw_ref[...].astype(cdt)                     # (2, 10, WC)
        w1 = w1_ref[...]                                   # bf16
        w2 = w2_ref[...]
        pb1 = pwb_ref[0]
        pb2 = pwb_ref[1, 0:(WC if use_kron else C)]

        def sample_body(s, carry):
            x = x_ref[s]                                   # (H, WC) f32
            cb = cond_ref[s]                               # (4, WC) f32

            # ---- norm1 -> depthwise 3x3 x2 -> residual (VPU / XLU phase) ----
            sc1, sh1 = _norm_coeffs(x, cb[0:1], cb[1:2], W, C, stack_stats)
            h = x.astype(cdt) * sc1.astype(cdt) + sh1.astype(cdt)
            h = _dwconv3x3(h, dw_c[0], W, C)
            h = _dwconv3x3(h, dw_c[1], W, C)
            xr = x + h.astype(f32)
            o_ref[s] = xr                                  # park the residual base

            # ---- norm2 -> 1x1 conv -> GELU -> 1x1 conv -> residual (MXU) ----
            sc2, sh2 = _norm_coeffs(xr, cb[2:3], cb[3:4], W, C, stack_stats)
            sc2c, sh2c = sc2.astype(cdt), sh2.astype(cdt)

            def chunk_body(c, carry2):
                h0 = pl.multiple_of(c * hb, hb)
                blk = o_ref[s, pl.ds(h0, hb), :]           # (hb, WC) f32
                if use_kron:
                    # Block-diagonal kron(I_W, W_1x1) weights feed the MXU
                    # straight from the fused layout: M=hb, K=W*C, N=W*Ch.
                    hn = (blk.astype(cdt) * sc2c + sh2c).astype(jnp.bfloat16)
                    z = jnp.dot(hn, w1, preferred_element_type=f32) + pb1
                    z = _gelu_tanh(z)
                    y = jnp.dot(z.astype(jnp.bfloat16), w2,
                                preferred_element_type=f32) + pb2
                else:
                    # Plain path (large C): stack the W lane-aligned slices
                    # along sublanes so the MXU sees M = W*hb, K = C, N = Ch
                    # (no W x FLOP / weight-byte inflation).
                    hn = blk * sc2 + sh2                   # f32: aligned tiles
                    m = jnp.concatenate(
                        [hn[:, w * C:(w + 1) * C] for w in range(W)], axis=0)
                    m = m.astype(jnp.bfloat16)             # (W*hb, C)
                    z = jnp.dot(m, w1, preferred_element_type=f32) + pb1
                    z = _gelu_tanh(z)
                    y2 = jnp.dot(z.astype(jnp.bfloat16), w2,
                                 preferred_element_type=f32) + pb2
                    y = jnp.concatenate(
                        [y2[w * hb:(w + 1) * hb, :] for w in range(W)], axis=1)
                # One unmasked lane-dense (hb, W*C) store per chunk.
                o_ref[s, pl.ds(h0, hb), :] = blk + y
                return carry2

            return lax.fori_loop(0, n_chunks, chunk_body, carry,
                                 unroll=(n_chunks == 1))

        lax.fori_loop(0, Bblk, sample_body, 0)

    return kernel


# ---------------------------- tiling / VMEM budgeting -----------------------------

def _vmem_estimate(Bblk, hb, H, W, C, Ch, use_kron, single_buffer):
    WC, WCh = W * C, W * Ch
    sample = H * WC * 4
    nbuf = 1 if single_buffer else 2
    est = 2 * 2 * Bblk * sample                 # x-in + out blocks, double buffered
    est += 2 * Bblk * 4 * WC * 4                # conditional affine
    est += nbuf * 2 * 10 * WC * 4               # depthwise taps + biases
    if use_kron:
        est += nbuf * (2 * WC * WCh * 2 + 2 * WCh * 4)
    else:
        est += nbuf * (2 * C * Ch * 2 + 2 * Ch * 4)
    est += 6 * sample                           # per-sample in-kernel values
    est += 4 * hb * WCh * 4                     # per-chunk MLP intermediates
    return est


def _pick_sizes(B, H, W, C, Ch, use_kron, gen, vmem_cap):
    WC, WCh = W * C, W * Ch
    vmem_limit = int(0.85 * vmem_cap)           # ~15% headroom for Mosaic scratch
    # H-chunk for the MLP: keep the f32 intermediate to a few MiB (tighter on
    # v7x's 64 MiB VMEM) while giving the MXU an M of >= 128-256 when H allows.
    inter_cap = (4 << 20) if gen >= 7 else (8 << 20)
    hb = _largest_divisor_leq(H, min(H, 256, max(1, inter_cap // (WCh * 4))))
    # Samples per grid step: target ~1-2 MiB of x per step (tiny per-step DMAs
    # cannot reach HBM bandwidth), bounded by B and by the VMEM budget.
    sample_bytes = H * WC * 4
    bblk = _largest_divisor_leq(B, max(1, (2 << 20) // max(sample_bytes, 1)))
    while bblk > 1 and (_vmem_estimate(bblk, hb, H, W, C, Ch, use_kron, True)
                        > 0.6 * vmem_limit):
        bblk = _largest_divisor_leq(B, bblk - 1)
    return hb, bblk, vmem_limit


# ------------------------------ pallas_call wrapper -------------------------------

def _run_block(xf, cond, prep, bblk, hb, vmem_limit, optimized, cdt):
    B, H, WC = xf.shape
    meta = prep["meta"]
    W, C, use_kron = meta["W"], meta["C"], meta["use_kron"]

    def invariant_spec(shape):
        zeros = (0,) * len(shape)
        if optimized:
            # Grid-invariant operand: a second buffer buys no overlap, so keep
            # a single VMEM copy.
            return pl.BlockSpec(shape, lambda b: zeros,
                                pipeline_mode=pl.Buffered(1))
        return pl.BlockSpec(shape, lambda b: zeros)

    return pl.pallas_call(
        _make_kernel(H, W, C, hb, bblk, use_kron, optimized, cdt),
        out_shape=jax.ShapeDtypeStruct((B, H, WC), jnp.float32),
        grid=(B // bblk,),
        in_specs=[
            pl.BlockSpec((bblk, H, WC), lambda b: (b, 0, 0)),   # x (fused NHWC)
            pl.BlockSpec((bblk, 4, WC), lambda b: (b, 0, 0)),   # label affine
            invariant_spec(prep["dw"].shape),                   # depthwise taps+bias
            invariant_spec(prep["w1"].shape),                   # 1x1 conv 1 (bf16)
            invariant_spec(prep["w2"].shape),                   # 1x1 conv 2 (bf16)
            invariant_spec(prep["pwb"].shape),                  # 1x1 conv biases
        ],
        out_specs=pl.BlockSpec((bblk, H, WC), lambda b: (b, 0, 0)),
        compiler_params=pltpu.CompilerParams(
            dimension_semantics=("parallel",),
            vmem_limit_bytes=vmem_limit,
        ),
    )(xf, cond, prep["dw"], prep["w1"], prep["w2"], prep["pwb"])


# ---------------------------- parameter preprocessing ------------------------------

def prepare_block_params(params, W):
    """One-time, call-invariant preprocessing (hoisted off the forward path):
    fused-layout tiling of the depthwise taps / biases, the kron-vs-plain 1x1
    conv weight choice and the bf16 weight casts all happen here."""
    C, Ch = params["pw1_w"].shape
    WC, WCh = W * C, W * Ch
    gen = _chip_gen()
    vmem_cap = _vmem_capacity_bytes(gen)
    # Plain (H*W, C) x (C, Ch) MXU path whenever the block-diagonal kron form
    # would inflate weight bytes / MXU FLOPs by W for nothing.
    kron_bytes = 2 * WC * WCh * 2
    use_kron = (C % 128 != 0) and (kron_bytes <= (8 << 20))
    # bf16 VPU maths for the norm / depthwise phase only where a bf16 VALU
    # exists (v6e, v7x); v5e and older keep all-f32.
    cdt = jnp.bfloat16 if gen >= 6 else jnp.float32

    dw = jnp.stack([
        jnp.concatenate([params["dw1_w"], params["dw1_b"]], axis=0),
        jnp.concatenate([params["dw2_w"], params["dw2_b"]], axis=0),
    ]).astype(jnp.float32)
    dw = jnp.tile(dw, (1, 1, W))                                    # (2, 10, WC)

    if use_kron:
        eye = jnp.eye(W, dtype=jnp.float32)
        w1 = jnp.kron(eye, params["pw1_w"]).astype(jnp.bfloat16)    # (WC, WCh)
        w2 = jnp.kron(eye, params["pw2_w"]).astype(jnp.bfloat16)    # (WCh, WC)
        pwb = jnp.zeros((2, WCh), jnp.float32)
        pwb = pwb.at[0].set(jnp.tile(params["pw1_b"][0], W))
        pwb = pwb.at[1, :WC].set(jnp.tile(params["pw2_b"][0], W))
    else:
        w1 = params["pw1_w"].astype(jnp.bfloat16)                   # (C, Ch)
        w2 = params["pw2_w"].astype(jnp.bfloat16)                   # (Ch, C)
        pwb = jnp.zeros((2, Ch), jnp.float32)
        pwb = pwb.at[0].set(params["pw1_b"][0])
        pwb = pwb.at[1, :C].set(params["pw2_b"][0])

    return dict(
        dw=dw, w1=w1, w2=w2, pwb=pwb,
        cn1_wg=params["cn1_wg"], cn1_wb=params["cn1_wb"],
        cn2_wg=params["cn2_wg"], cn2_wb=params["cn2_wb"],
        meta=dict(W=W, C=C, Ch=Ch, use_kron=use_kron, cdt=cdt,
                  gen=gen, vmem_cap=vmem_cap),
    )


# ------------------------------------- forward -------------------------------------

def mlpcbn_depthwise_block(x_nhwc, label, prep):
    """Forward pass.  x_nhwc: (B, H, W, C) f32, label: (B, label_dim) f32.

    NHWC in / NHWC out so no layout transpose touches the HBM path; a PyTorch
    NCHW caller should permute once at the model boundary, not per block.
    """
    B, H, W, C = x_nhwc.shape
    meta = prep["meta"]
    assert (W, C) == (meta["W"], meta["C"]), "prepare_block_params geometry mismatch"
    WC = W * C

    # Per-sample conditional affine (label-dependent, so per call): pre-tiled
    # onto the fused lane axis as [gamma1, beta1, gamma2, beta2].
    g1 = 1.0 + label @ prep["cn1_wg"]
    b1 = label @ prep["cn1_wb"]
    g2 = 1.0 + label @ prep["cn2_wg"]
    b2 = label @ prep["cn2_wb"]
    cond = jnp.tile(jnp.stack([g1, b1, g2, b2], axis=1), (1, 1, W))    # (B,4,WC)

    xf = x_nhwc.reshape(B, H, WC)        # free reshape: W, C adjacent in memory
    hb, bblk, vmem_limit = _pick_sizes(B, H, W, C, meta["Ch"],
                                       meta["use_kron"], meta["gen"],
                                       meta["vmem_cap"])
    try:
        out = _run_block(xf, cond, prep, bblk, hb, vmem_limit,
                         optimized=True, cdt=meta["cdt"])
    except Exception:
        # Graceful degradation for toolchains without BlockSpec pipeline_mode or
        # without packed (bf16) roll / sub-tile concat support: double-buffered
        # invariants, separate stat ladders, all-f32 VPU maths.  (The compile
        # error surfaces at call time when running eagerly, as in __main__.)
        out = _run_block(xf, cond, prep, bblk, hb, vmem_limit,
                         optimized=False, cdt=jnp.float32)
    return out.reshape(B, H, W, C)


# ----------------------------- parameter initialization ----------------------------

def init_params(key, channel, kernel=3, label_dim=8):
    ch = channel * 2
    ks = jax.random.split(key, 12)
    s = 0.1
    n = lambda k, shape: jax.random.normal(k, shape, jnp.float32) * s
    return dict(
        # ConditionalNorm: label -> (gamma offset, beta)
        cn1_wg=n(ks[0], (label_dim, channel)),
        cn1_wb=n(ks[1], (label_dim, channel)),
        cn2_wg=n(ks[2], (label_dim, channel)),
        cn2_wb=n(ks[3], (label_dim, channel)),
        # DepthwiseModule: two depthwise 3x3 convs (groups=channel)
        dw1_w=n(ks[4], (kernel * kernel, channel)),
        dw1_b=n(ks[5], (1, channel)),
        dw2_w=n(ks[6], (kernel * kernel, channel)),
        dw2_b=n(ks[7], (1, channel)),
        # module2: Conv2d(C, 2C, 1) -> GELU -> Conv2d(2C, C, 1)
        pw1_w=n(ks[8], (channel, ch)),
        pw1_b=n(ks[9], (1, ch)),
        pw2_w=n(ks[10], (ch, channel)),
        pw2_b=n(ks[11], (1, channel)),
    )


# -------------------------------- pure-JAX reference --------------------------------

def reference_forward(x, label, params):
    """All-f32, erf-GELU reference (NHWC), matching the PyTorch module."""
    g1 = 1.0 + label @ params["cn1_wg"]
    b1 = label @ params["cn1_wb"]
    g2 = 1.0 + label @ params["cn2_wg"]
    b2 = label @ params["cn2_wb"]

    def norm(t, g, b):
        m = jnp.mean(t, axis=(1, 2), keepdims=True)
        v = jnp.mean((t - m) ** 2, axis=(1, 2), keepdims=True)
        return (t - m) / jnp.sqrt(v + _EPS) * g[:, None, None, :] + b[:, None, None, :]

    def dwconv(t, w, bias):
        H, W = t.shape[1], t.shape[2]
        p = jnp.pad(t, ((0, 0), (1, 1), (1, 1), (0, 0)), mode="wrap")
        out = jnp.zeros_like(t)
        for kh in range(3):
            for kw in range(3):
                out = out + p[:, kh:kh + H, kw:kw + W, :] * w[kh * 3 + kw][None, None, None, :]
        return out + bias[0][None, None, None, :]

    h = norm(x, g1, b1)
    h = dwconv(h, params["dw1_w"], params["dw1_b"])
    h = dwconv(h, params["dw2_w"], params["dw2_b"])
    x = x + h
    h = norm(x, g2, b2)
    h = h @ params["pw1_w"] + params["pw1_b"][0]
    h = jax.nn.gelu(h, approximate=False)
    h = h @ params["pw2_w"] + params["pw2_b"][0]
    return x + h


# -------------------------------------- main ----------------------------------------

if __name__ == "__main__":
    LABEL_DIM = 8
    cases = [
        # (B, H, W, C)
        (2, 16, 16, 8),     # W*C = 128: fused lane-dense layout, kron 1x1 path
        (1, 8, 8, 128),     # C = 128:   plain (H*W, C) MXU path
        (2, 512, 16, 8),    # tall H:    multi-chunk MLP fori loop (hb=256, 2 chunks)
    ]
    root = jax.random.PRNGKey(0)
    for idx, (B, H, W, C) in enumerate(cases):
        kx, kl, kp = jax.random.split(jax.random.fold_in(root, idx), 3)
        x = jax.random.normal(kx, (B, H, W, C), jnp.float32)
        label = jax.random.normal(kl, (B, LABEL_DIM), jnp.float32)
        params = init_params(kp, C, kernel=3, label_dim=LABEL_DIM)
        prep = prepare_block_params(params, W)
        out = jax.block_until_ready(mlpcbn_depthwise_block(x, label, prep))
        ref = reference_forward(x, label, params)
        assert out.shape == (B, H, W, C), out.shape
        max_err = float(jnp.max(jnp.abs(out - ref)))
        # Tolerance covers bf16 MXU operands, (v6e/v7x) bf16 norm/conv maths and
        # tanh-GELU vs the all-f32 / erf-GELU reference; structural errors would
        # be O(0.1 .. 1).
        tol = 5e-2 if prep["meta"]["cdt"] == jnp.float32 else 7.5e-2
        assert max_err < tol, f"case {idx} {(B, H, W, C)}: max abs err {max_err}"
    print("KERNEL_OK")
</pallas_src>

<mosaic_0001>
module attributes {stable_mosaic.version = 11 : i64} {
  func.func @kernel(%arg0: i32, %arg1: memref<2x16x128xf32, #tpu.memory_space<vmem>>, %arg2: memref<2x4x128xf32, #tpu.memory_space<vmem>>, %arg3: memref<2x10x128xf32, #tpu.memory_space<vmem>>, %arg4: memref<128x256xbf16, #tpu.memory_space<vmem>>, %arg5: memref<256x128xbf16, #tpu.memory_space<vmem>>, %arg6: memref<2x256xf32, #tpu.memory_space<vmem>>, %arg7: memref<2x16x128xf32, #tpu.memory_space<vmem>>) attributes {dimension_semantics = [#tpu.dimension_semantics<parallel>], iteration_bounds = array<i64: 1>, scalar_prefetch = 0 : i64, scratch_operands = 0 : i64, tpu.core_type = #tpu.core_type<tc>, window_params = [{transform_indices = @transform_0, window_bounds = array<i64: 2, 16, 128>}, {transform_indices = @transform_1, window_bounds = array<i64: 2, 4, 128>}, {pipeline_mode = #tpu.pipeline_mode<synchronous>, transform_indices = @transform_2, window_bounds = array<i64: 2, 10, 128>}, {pipeline_mode = #tpu.pipeline_mode<synchronous>, transform_indices = @transform_3, window_bounds = array<i64: 128, 256>}, {pipeline_mode = #tpu.pipeline_mode<synchronous>, transform_indices = @transform_4, window_bounds = array<i64: 256, 128>}, {pipeline_mode = #tpu.pipeline_mode<synchronous>, transform_indices = @transform_5, window_bounds = array<i64: 2, 256>}, {transform_indices = @transform_6, window_bounds = array<i64: 2, 16, 128>}]} {
    %c0 = arith.constant 0 : index
    %c0_0 = arith.constant 0 : index
    %c0_1 = arith.constant 0 : index
    %0 = vector.load %arg3[%c0, %c0_0, %c0_1] : memref<2x10x128xf32, #tpu.memory_space<vmem>>, vector<2x10x128xf32>
    %c0_2 = arith.constant 0 : index
    %c0_3 = arith.constant 0 : index
    %1 = vector.load %arg4[%c0_2, %c0_3] : memref<128x256xbf16, #tpu.memory_space<vmem>>, vector<128x256xbf16>
    %c0_4 = arith.constant 0 : index
    %c0_5 = arith.constant 0 : index
    %2 = vector.load %arg5[%c0_4, %c0_5] : memref<256x128xbf16, #tpu.memory_space<vmem>>, vector<256x128xbf16>
    %c0_6 = arith.constant 0 : index
    %c0_7 = arith.constant 0 : index
    %3 = vector.load %arg6[%c0_6, %c0_7] : memref<2x256xf32, #tpu.memory_space<vmem>>, vector<1x256xf32>
    %4 = vector.shape_cast %3 : vector<1x256xf32> to vector<256xf32>
    %c1 = arith.constant 1 : index
    %c0_8 = arith.constant 0 : index
    %5 = vector.load %arg6[%c1, %c0_8] : memref<2x256xf32, #tpu.memory_space<vmem>>, vector<1x128xf32>
    %6 = vector.shape_cast %5 : vector<1x128xf32> to vector<128xf32>
    %c0_i32 = arith.constant 0 : i32
    %c2_i32 = arith.constant 2 : i32
    %7 = arith.addi %c0_i32, %c2_i32 : i32
    %c1_i32 = arith.constant 1 : i32
    scf.for %arg8 = %c0_i32 to %7 step %c1_i32  : i32 {
      %8 = arith.index_cast %arg8 : i32 to index
      %c0_10 = arith.constant 0 : index
      %c0_11 = arith.constant 0 : index
      %9 = vector.load %arg1[%8, %c0_10, %c0_11] : memref<2x16x128xf32, #tpu.memory_space<vmem>>, vector<1x16x128xf32>
      %10 = vector.shape_cast %9 : vector<1x16x128xf32> to vector<16x128xf32>
      %11 = arith.index_cast %arg8 : i32 to index
      %c0_12 = arith.constant 0 : index
      %c0_13 = arith.constant 0 : index
      %12 = vector.load %arg2[%11, %c0_12, %c0_13] : memref<2x4x128xf32, #tpu.memory_space<vmem>>, vector<1x4x128xf32>
      %13 = vector.shape_cast %12 : vector<1x4x128xf32> to vector<4x128xf32>
      %14 = vector.extract_strided_slice %13 {offsets = [0, 0], sizes = [1, 128], strides = [1, 1]} : vector<4x128xf32> to vector<1x128xf32>
      %15 = vector.extract_strided_slice %13 {offsets = [1, 0], sizes = [1, 128], strides = [1, 1]} : vector<4x128xf32> to vector<1x128xf32>
      %16 = vector.extract_strided_slice %10 {offsets = [0, 0], sizes = [1, 128], strides = [1, 1]} : vector<16x128xf32> to vector<1x128xf32>
      %c8_i32 = arith.constant 8 : i32
      %17 = tpu.dynamic_rotate %16 by %c8_i32 dim 1 : vector<1x128xf32>, i32 -> vector<1x128xf32>
      %18 = arith.addf %16, %17 : vector<1x128xf32>
      %c16_i32 = arith.constant 16 : i32
      %19 = tpu.dynamic_rotate %18 by %c16_i32 dim 1 : vector<1x128xf32>, i32 -> vector<1x128xf32>
      %20 = arith.addf %18, %19 : vector<1x128xf32>
      %c32_i32 = arith.constant 32 : i32
      %21 = tpu.dynamic_rotate %20 by %c32_i32 dim 1 : vector<1x128xf32>, i32 -> vector<1x128xf32>
      %22 = arith.addf %20, %21 : vector<1x128xf32>
      %c64_i32 = arith.constant 64 : i32
      %23 = tpu.dynamic_rotate %22 by %c64_i32 dim 1 : vector<1x128xf32>, i32 -> vector<1x128xf32>
      %24 = arith.addf %22, %23 : vector<1x128xf32>
      %cst = arith.constant 6.250000e-02 : f32
      %25 = vector.broadcast %cst : f32 to vector<1x128xf32>
      %26 = arith.mulf %24, %25 : vector<1x128xf32>
      %27 = vector.broadcast %26 : vector<1x128xf32> to vector<16x128xf32>
      %28 = arith.subf %10, %27 : vector<16x128xf32>
      %cst_14 = arith.constant dense<0.000000e+00> : vector<128xf32>
      %29 = vector.multi_reduction <add>, %28, %cst_14 [0] : vector<16x128xf32> to vector<128xf32>
      %30 = vector.shape_cast %29 : vector<128xf32> to vector<1x128xf32>
      %31 = arith.mulf %28, %28 : vector<16x128xf32>
      %cst_15 = arith.constant dense<0.000000e+00> : vector<128xf32>
      %32 = vector.multi_reduction <add>, %31, %cst_15 [0] : vector<16x128xf32> to vector<128xf32>
      %33 = vector.shape_cast %32 : vector<128xf32> to vector<1x128xf32>
      %34 = tpu.concatenate %30, %33 in 0 : vector<1x128xf32>, vector<1x128xf32> -> vector<2x128xf32>
      %c8_i32_16 = arith.constant 8 : i32
      %35 = tpu.dynamic_rotate %34 by %c8_i32_16 dim 1 : vector<2x128xf32>, i32 -> vector<2x128xf32>
      %36 = arith.addf %34, %35 : vector<2x128xf32>
      %c16_i32_17 = arith.constant 16 : i32
      %37 = tpu.dynamic_rotate %36 by %c16_i32_17 dim 1 : vector<2x128xf32>, i32 -> vector<2x128xf32>
      %38 = arith.addf %36, %37 : vector<2x128xf32>
      %c32_i32_18 = arith.constant 32 : i32
      %39 = tpu.dynamic_rotate %38 by %c32_i32_18 dim 1 : vector<2x128xf32>, i32 -> vector<2x128xf32>
      %40 = arith.addf %38, %39 : vector<2x128xf32>
      %c64_i32_19 = arith.constant 64 : i32
      %41 = tpu.dynamic_rotate %40 by %c64_i32_19 dim 1 : vector<2x128xf32>, i32 -> vector<2x128xf32>
      %42 = arith.addf %40, %41 : vector<2x128xf32>
      %43 = vector.extract_strided_slice %42 {offsets = [0, 0], sizes = [1, 128], strides = [1, 1]} : vector<2x128xf32> to vector<1x128xf32>
      %44 = vector.extract_strided_slice %42 {offsets = [1, 0], sizes = [1, 128], strides = [1, 1]} : vector<2x128xf32> to vector<1x128xf32>
      %cst_20 = arith.constant 3.906250e-03 : f32
      %45 = vector.broadcast %cst_20 : f32 to vector<1x128xf32>
      %46 = arith.mulf %43, %45 : vector<1x128xf32>
      %cst_21 = arith.constant 3.906250e-03 : f32
      %47 = vector.broadcast %cst_21 : f32 to vector<1x128xf32>
      %48 = arith.mulf %44, %47 : vector<1x128xf32>
      %49 = arith.mulf %46, %46 : vector<1x128xf32>
      %50 = arith.subf %48, %49 : vector<1x128xf32>
      %cst_22 = arith.constant 0.000000e+00 : f32
      %51 = vector.broadcast %cst_22 : f32 to vector<1x128xf32>
      %52 = arith.maximumf %50, %51 : vector<1x128xf32>
      %cst_23 = arith.constant 9.99999974E-6 : f32
      %53 = vector.broadcast %cst_23 : f32 to vector<1x128xf32>
      %54 = arith.addf %52, %53 : vector<1x128xf32>
      %55 = math.rsqrt %54 : vector<1x128xf32>
      %56 = arith.mulf %14, %55 : vector<1x128xf32>
      %57 = arith.addf %26, %46 : vector<1x128xf32>
      %58 = arith.mulf %57, %56 : vector<1x128xf32>
      %59 = arith.subf %15, %58 : vector<1x128xf32>
      %60 = vector.broadcast %56 : vector<1x128xf32> to vector<16x128xf32>
      %61 = arith.mulf %10, %60 : vector<16x128xf32>
      %62 = vector.broadcast %59 : vector<1x128xf32> to vector<16x128xf32>
      %63 = arith.addf %61, %62 : vector<16x128xf32>
      %64 = vector.extract_strided_slice %0 {offsets = [0, 0, 0], sizes = [1, 10, 128], strides = [1, 1, 1]} : vector<2x10x128xf32> to vector<1x10x128xf32>
      %65 = vector.shape_cast %64 : vector<1x10x128xf32> to vector<10x128xf32>
      %c1_i32_24 = arith.constant 1 : i32
      %66 = tpu.dynamic_rotate %63 by %c1_i32_24 dim 0 : vector<16x128xf32>, i32 -> vector<16x128xf32>
      %c8_i32_25 = arith.constant 8 : i32
      %67 = tpu.dynamic_rotate %66 by %c8_i32_25 dim 1 : vector<16x128xf32>, i32 -> vector<16x128xf32>
      %68 = vector.extract_strided_slice %65 {offsets = [0, 0], sizes = [1, 128], strides = [1, 1]} : vector<10x128xf32> to vector<1x128xf32>
      %69 = vector.shape_cast %68 : vector<1x128xf32> to vector<128xf32>
      %70 = vector.shape_cast %69 : vector<128xf32> to vector<1x128xf32>
      %71 = vector.broadcast %70 : vector<1x128xf32> to vector<16x128xf32>
      %72 = arith.mulf %67, %71 : vector<16x128xf32>
      %73 = vector.extract_strided_slice %65 {offsets = [1, 0], sizes = [1, 128], strides = [1, 1]} : vector<10x128xf32> to vector<1x128xf32>
      %74 = vector.shape_cast %73 : vector<1x128xf32> to vector<128xf32>
      %75 = vector.shape_cast %74 : vector<128xf32> to vector<1x128xf32>
      %76 = vector.broadcast %75 : vector<1x128xf32> to vector<16x128xf32>
      %77 = arith.mulf %66, %76 : vector<16x128xf32>
      %78 = arith.addf %72, %77 : vector<16x128xf32>
      %c120_i32 = arith.constant 120 : i32
      %79 = tpu.dynamic_rotate %66 by %c120_i32 dim 1 : vector<16x128xf32>, i32 -> vector<16x128xf32>
      %80 = vector.extract_strided_slice %65 {offsets = [2, 0], sizes = [1, 128], strides = [1, 1]} : vector<10x128xf32> to vector<1x128xf32>
      %81 = vector.shape_cast %80 : vector<1x128xf32> to vector<128xf32>
      %82 = vector.shape_cast %81 : vector<128xf32> to vector<1x128xf32>
      %83 = vector.broadcast %82 : vector<1x128xf32> to vector<16x128xf32>
      %84 = arith.mulf %79, %83 : vector<16x128xf32>
      %85 = arith.addf %78, %84 : vector<16x128xf32>
      %c8_i32_26 = arith.constant 8 : i32
      %86 = tpu.dynamic_rotate %63 by %c8_i32_26 dim 1 : vector<16x128xf32>, i32 -> vector<16x128xf32>
      %87 = vector.extract_strided_slice %65 {offsets = [3, 0], sizes = [1, 128], strides = [1, 1]} : vector<10x128xf32> to vector<1x128xf32>
      %88 = vector.shape_cast %87 : vector<1x128xf32> to vector<128xf32>
      %89 = vector.shape_cast %88 : vector<128xf32> to vector<1x128xf32>
      %90 = vector.broadcast %89 : vector<1x128xf32> to vector<16x128xf32>
      %91 = arith.mulf %86, %90 : vector<16x128xf32>
      %92 = arith.addf %85, %91 : vector<16x128xf32>
      %93 = vector.extract_strided_slice %65 {offsets = [4, 0], sizes = [1, 128], strides = [1, 1]} : vector<10x128xf32> to vector<1x128xf32>
      %94 = vector.shape_cast %93 : vector<1x128xf32> to vector<128xf32>
      %95 = vector.shape_cast %94 : vector<128xf32> to vector<1x128xf32>
      %96 = vector.broadcast %95 : vector<1x128xf32> to vector<16x128xf32>
      %97 = arith.mulf %63, %96 : vector<16x128xf32>
      %98 = arith.addf %92, %97 : vector<16x128xf32>
      %c120_i32_27 = arith.constant 120 : i32
      %99 = tpu.dynamic_rotate %63 by %c120_i32_27 dim 1 : vector<16x128xf32>, i32 -> vector<16x128xf32>
      %100 = vector.extract_strided_slice %65 {offsets = [5, 0], sizes = [1, 128], strides = [1, 1]} : vector<10x128xf32> to vector<1x128xf32>
      %101 = vector.shape_cast %100 : vector<1x128xf32> to vector<128xf32>
      %102 = vector.shape_cast %101 : vector<128xf32> to vector<1x128xf32>
      %103 = vector.broadcast %102 : vector<1x128xf32> to vector<16x128xf32>
      %104 = arith.mulf %99, %103 : vector<16x128xf32>
      %105 = arith.addf %98, %104 : vector<16x128xf32>
      %c15_i32 = arith.constant 15 : i32
      %106 = tpu.dynamic_rotate %63 by %c15_i32 dim 0 : vector<16x128xf32>, i32 -> vector<16x128xf32>
      %c8_i32_28 = arith.constant 8 : i32
      %107 = tpu.dynamic_rotate %106 by %c8_i32_28 dim 1 : vector<16x128xf32>, i32 -> vector<16x128xf32>
      %108 = vector.extract_strided_slice %65 {offsets = [6, 0], sizes = [1, 128], strides = [1, 1]} : vector<10x128xf32> to vector<1x128xf32>
      %109 = vector.shape_cast %108 : vector<1x128xf32> to vector<128xf32>
      %110 = vector.shape_cast %109 : vector<128xf32> to vector<1x128xf32>
      %111 = vector.broadcast %110 : vector<1x128xf32> to vector<16x128xf32>
      %112 = arith.mulf %107, %111 : vector<16x128xf32>
      %113 = arith.addf %105, %112 : vector<16x128xf32>
      %114 = vector.extract_strided_slice %65 {offsets = [7, 0], sizes = [1, 128], strides = [1, 1]} : vector<10x128xf32> to vector<1x128xf32>
      %115 = vector.shape_cast %114 : vector<1x128xf32> to vector<128xf32>
      %116 = vector.shape_cast %115 : vector<128xf32> to vector<1x128xf32>
      %117 = vector.broadcast %116 : vector<1x128xf32> to vector<16x128xf32>
      %118 = arith.mulf %106, %117 : vector<16x128xf32>
      %119 = arith.addf %113, %118 : vector<16x128xf32>
      %c120_i32_29 = arith.constant 120 : i32
      %120 = tpu.dynamic_rotate %106 by %c120_i32_29 dim 1 : vector<16x128xf32>, i32 -> vector<16x128xf32>
      %121 = vector.extract_strided_slice %65 {offsets = [8, 0], sizes = [1, 128], strides = [1, 1]} : vector<10x128xf32> to vector<1x128xf32>
      %122 = vector.shape_cast %121 : vector<1x128xf32> to vector<128xf32>
      %123 = vector.shape_cast %122 : vector<128xf32> to vector<1x128xf32>
      %124 = vector.broadcast %123 : vector<1x128xf32> to vector<16x128xf32>
      %125 = arith.mulf %120, %124 : vector<16x128xf32>
      %126 = arith.addf %119, %125 : vector<16x128xf32>
      %127 = vector.extract_strided_slice %65 {offsets = [9, 0], sizes = [1, 128], strides = [1, 1]} : vector<10x128xf32> to vector<1x128xf32>
      %128 = vector.shape_cast %127 : vector<1x128xf32> to vector<128xf32>
      %129 = vector.shape_cast %128 : vector<128xf32> to vector<1x128xf32>
      %130 = vector.broadcast %129 : vector<1x128xf32> to vector<16x128xf32>
      %131 = arith.addf %126, %130 : vector<16x128xf32>
      %132 = vector.extract_strided_slice %0 {offsets = [1, 0, 0], sizes = [1, 10, 128], strides = [1, 1, 1]} : vector<2x10x128xf32> to vector<1x10x128xf32>
      %133 = vector.shape_cast %132 : vector<1x10x128xf32> to vector<10x128xf32>
      %c1_i32_30 = arith.constant 1 : i32
      %134 = tpu.dynamic_rotate %131 by %c1_i32_30 dim 0 : vector<16x128xf32>, i32 -> vector<16x128xf32>
      %c8_i32_31 = arith.constant 8 : i32
      %135 = tpu.dynamic_rotate %134 by %c8_i32_31 dim 1 : vector<16x128xf32>, i32 -> vector<16x128xf32>
      %136 = vector.extract_strided_slice %133 {offsets = [0, 0], sizes = [1, 128], strides = [1, 1]} : vector<10x128xf32> to vector<1x128xf32>
      %137 = vector.shape_cast %136 : vector<1x128xf32> to vector<128xf32>
      %138 = vector.shape_cast %137 : vector<128xf32> to vector<1x128xf32>
      %139 = vector.broadcast %138 : vector<1x128xf32> to vector<16x128xf32>
      %140 = arith.mulf %135, %139 : vector<16x128xf32>
      %141 = vector.extract_strided_slice %133 {offsets = [1, 0], sizes = [1, 128], strides = [1, 1]} : vector<10x128xf32> to vector<1x128xf32>
      %142 = vector.shape_cast %141 : vector<1x128xf32> to vector<128xf32>
      %143 = vector.shape_cast %142 : vector<128xf32> to vector<1x128xf32>
      %144 = vector.broadcast %143 : vector<1x128xf32> to vector<16x128xf32>
      %145 = arith.mulf %134, %144 : vector<16x128xf32>
      %146 = arith.addf %140, %145 : vector<16x128xf32>
      %c120_i32_32 = arith.constant 120 : i32
      %147 = tpu.dynamic_rotate %134 by %c120_i32_32 dim 1 : vector<16x128xf32>, i32 -> vector<16x128xf32>
      %148 = vector.extract_strided_slice %133 {offsets = [2, 0], sizes = [1, 128], strides = [1, 1]} : vector<10x128xf32> to vector<1x128xf32>
      %149 = vector.shape_cast %148 : vector<1x128xf32> to vector<128xf32>
      %150 = vector.shape_cast %149 : vector<128xf32> to vector<1x128xf32>
      %151 = vector.broadcast %150 : vector<1x128xf32> to vector<16x128xf32>
      %152 = arith.mulf %147, %151 : vector<16x128xf32>
      %153 = arith.addf %146, %152 : vector<16x128xf32>
      %c8_i32_33 = arith.constant 8 : i32
      %154 = tpu.dynamic_rotate %131 by %c8_i32_33 dim 1 : vector<16x128xf32>, i32 -> vector<16x128xf32>
      %155 = vector.extract_strided_slice %133 {offsets = [3, 0], sizes = [1, 128], strides = [1, 1]} : vector<10x128xf32> to vector<1x128xf32>
      %156 = vector.shape_cast %155 : vector<1x128xf32> to vector<128xf32>
      %157 = vector.shape_cast %156 : vector<128xf32> to vector<1x128xf32>
      %158 = vector.broadcast %157 : vector<1x128xf32> to vector<16x128xf32>
      %159 = arith.mulf %154, %158 : vector<16x128xf32>
      %160 = arith.addf %153, %159 : vector<16x128xf32>
      %161 = vector.extract_strided_slice %133 {offsets = [4, 0], sizes = [1, 128], strides = [1, 1]} : vector<10x128xf32> to vector<1x128xf32>
      %162 = vector.shape_cast %161 : vector<1x128xf32> to vector<128xf32>
      %163 = vector.shape_cast %162 : vector<128xf32> to vector<1x128xf32>
      %164 = vector.broadcast %163 : vector<1x128xf32> to vector<16x128xf32>
      %165 = arith.mulf %131, %164 : vector<16x128xf32>
      %166 = arith.addf %160, %165 : vector<16x128xf32>
      %c120_i32_34 = arith.constant 120 : i32
      %167 = tpu.dynamic_rotate %131 by %c120_i32_34 dim 1 : vector<16x128xf32>, i32 -> vector<16x128xf32>
      %168 = vector.extract_strided_slice %133 {offsets = [5, 0], sizes = [1, 128], strides = [1, 1]} : vector<10x128xf32> to vector<1x128xf32>
      %169 = vector.shape_cast %168 : vector<1x128xf32> to vector<128xf32>
      %170 = vector.shape_cast %169 : vector<128xf32> to vector<1x128xf32>
      %171 = vector.broadcast %170 : vector<1x128xf32> to vector<16x128xf32>
      %172 = arith.mulf %167, %171 : vector<16x128xf32>
      %173 = arith.addf %166, %172 : vector<16x128xf32>
      %c15_i32_35 = arith.constant 15 : i32
      %174 = tpu.dynamic_rotate %131 by %c15_i32_35 dim 0 : vector<16x128xf32>, i32 -> vector<16x128xf32>
      %c8_i32_36 = arith.constant 8 : i32
      %175 = tpu.dynamic_rotate %174 by %c8_i32_36 dim 1 : vector<16x128xf32>, i32 -> vector<16x128xf32>
      %176 = vector.extract_strided_slice %133 {offsets = [6, 0], sizes = [1, 128], strides = [1, 1]} : vector<10x128xf32> to vector<1x128xf32>
      %177 = vector.shape_cast %176 : vector<1x128xf32> to vector<128xf32>
      %178 = vector.shape_cast %177 : vector<128xf32> to vector<1x128xf32>
      %179 = vector.broadcast %178 : vector<1x128xf32> to vector<16x128xf32>
      %180 = arith.mulf %175, %179 : vector<16x128xf32>
      %181 = arith.addf %173, %180 : vector<16x128xf32>
      %182 = vector.extract_strided_slice %133 {offsets = [7, 0], sizes = [1, 128], strides = [1, 1]} : vector<10x128xf32> to vector<1x128xf32>
      %183 = vector.shape_cast %182 : vector<1x128xf32> to vector<128xf32>
      %184 = vector.shape_cast %183 : vector<128xf32> to vector<1x128xf32>
      %185 = vector.broadcast %184 : vector<1x128xf32> to vector<16x128xf32>
      %186 = arith.mulf %174, %185 : vector<16x128xf32>
      %187 = arith.addf %181, %186 : vector<16x128xf32>
      %c120_i32_37 = arith.constant 120 : i32
      %188 = tpu.dynamic_rotate %174 by %c120_i32_37 dim 1 : vector<16x128xf32>, i32 -> vector<16x128xf32>
      %189 = vector.extract_strided_slice %133 {offsets = [8, 0], sizes = [1, 128], strides = [1, 1]} : vector<10x128xf32> to vector<1x128xf32>
      %190 = vector.shape_cast %189 : vector<1x128xf32> to vector<128xf32>
      %191 = vector.shape_cast %190 : vector<128xf32> to vector<1x128xf32>
      %192 = vector.broadcast %191 : vector<1x128xf32> to vector<16x128xf32>
      %193 = arith.mulf %188, %192 : vector<16x128xf32>
      %194 = arith.addf %187, %193 : vector<16x128xf32>
      %195 = vector.extract_strided_slice %133 {offsets = [9, 0], sizes = [1, 128], strides = [1, 1]} : vector<10x128xf32> to vector<1x128xf32>
      %196 = vector.shape_cast %195 : vector<1x128xf32> to vector<128xf32>
      %197 = vector.shape_cast %196 : vector<128xf32> to vector<1x128xf32>
      %198 = vector.broadcast %197 : vector<1x128xf32> to vector<16x128xf32>
      %199 = arith.addf %194, %198 : vector<16x128xf32>
      %200 = arith.addf %10, %199 : vector<16x128xf32>
      %201 = arith.index_cast %arg8 : i32 to index
      %c0_38 = arith.constant 0 : index
      %c0_39 = arith.constant 0 : index
      %202 = vector.load %arg7[%201, %c0_38, %c0_39] : memref<2x16x128xf32, #tpu.memory_space<vmem>>, vector<1x16x128xf32>
      %203 = vector.shape_cast %202 : vector<1x16x128xf32> to vector<16x128xf32>
      %204 = vector.shape_cast %200 : vector<16x128xf32> to vector<1x16x128xf32>
      tpu.vector_store %arg7[%201, %c0_38, %c0_39], %204 {strides = array<i32>} : memref<2x16x128xf32, #tpu.memory_space<vmem>>, vector<1x16x128xf32>,
      %205 = vector.extract_strided_slice %13 {offsets = [2, 0], sizes = [1, 128], strides = [1, 1]} : vector<4x128xf32> to vector<1x128xf32>
      %206 = vector.extract_strided_slice %13 {offsets = [3, 0], sizes = [1, 128], strides = [1, 1]} : vector<4x128xf32> to vector<1x128xf32>
      %207 = vector.extract_strided_slice %200 {offsets = [0, 0], sizes = [1, 128], strides = [1, 1]} : vector<16x128xf32> to vector<1x128xf32>
      %c8_i32_40 = arith.constant 8 : i32
      %208 = tpu.dynamic_rotate %207 by %c8_i32_40 dim 1 : vector<1x128xf32>, i32 -> vector<1x128xf32>
      %209 = arith.addf %207, %208 : vector<1x128xf32>
      %c16_i32_41 = arith.constant 16 : i32
      %210 = tpu.dynamic_rotate %209 by %c16_i32_41 dim 1 : vector<1x128xf32>, i32 -> vector<1x128xf32>
      %211 = arith.addf %209, %210 : vector<1x128xf32>
      %c32_i32_42 = arith.constant 32 : i32
      %212 = tpu.dynamic_rotate %211 by %c32_i32_42 dim 1 : vector<1x128xf32>, i32 -> vector<1x128xf32>
      %213 = arith.addf %211, %212 : vector<1x128xf32>
      %c64_i32_43 = arith.constant 64 : i32
      %214 = tpu.dynamic_rotate %213 by %c64_i32_43 dim 1 : vector<1x128xf32>, i32 -> vector<1x128xf32>
      %215 = arith.addf %213, %214 : vector<1x128xf32>
      %cst_44 = arith.constant 6.250000e-02 : f32
      %216 = vector.broadcast %cst_44 : f32 to vector<1x128xf32>
      %217 = arith.mulf %215, %216 : vector<1x128xf32>
      %218 = vector.broadcast %217 : vector<1x128xf32> to vector<16x128xf32>
      %219 = arith.subf %200, %218 : vector<16x128xf32>
      %cst_45 = arith.constant dense<0.000000e+00> : vector<128xf32>
      %220 = vector.multi_reduction <add>, %219, %cst_45 [0] : vector<16x128xf32> to vector<128xf32>
      %221 = vector.shape_cast %220 : vector<128xf32> to vector<1x128xf32>
      %222 = arith.mulf %219, %219 : vector<16x128xf32>
      %cst_46 = arith.constant dense<0.000000e+00> : vector<128xf32>
      %223 = vector.multi_reduction <add>, %222, %cst_46 [0] : vector<16x128xf32> to vector<128xf32>
      %224 = vector.shape_cast %223 : vector<128xf32> to vector<1x128xf32>
      %225 = tpu.concatenate %221, %224 in 0 : vector<1x128xf32>, vector<1x128xf32> -> vector<2x128xf32>
      %c8_i32_47 = arith.constant 8 : i32
      %226 = tpu.dynamic_rotate %225 by %c8_i32_47 dim 1 : vector<2x128xf32>, i32 -> vector<2x128xf32>
      %227 = arith.addf %225, %226 : vector<2x128xf32>
      %c16_i32_48 = arith.constant 16 : i32
      %228 = tpu.dynamic_rotate %227 by %c16_i32_48 dim 1 : vector<2x128xf32>, i32 -> vector<2x128xf32>
      %229 = arith.addf %227, %228 : vector<2x128xf32>
      %c32_i32_49 = arith.constant 32 : i32
      %230 = tpu.dynamic_rotate %229 by %c32_i32_49 dim 1 : vector<2x128xf32>, i32 -> vector<2x128xf32>
      %231 = arith.addf %229, %230 : vector<2x128xf32>
      %c64_i32_50 = arith.constant 64 : i32
      %232 = tpu.dynamic_rotate %231 by %c64_i32_50 dim 1 : vector<2x128xf32>, i32 -> vector<2x128xf32>
      %233 = arith.addf %231, %232 : vector<2x128xf32>
      %234 = vector.extract_strided_slice %233 {offsets = [0, 0], sizes = [1, 128], strides = [1, 1]} : vector<2x128xf32> to vector<1x128xf32>
      %235 = vector.extract_strided_slice %233 {offsets = [1, 0], sizes = [1, 128], strides = [1, 1]} : vector<2x128xf32> to vector<1x128xf32>
      %cst_51 = arith.constant 3.906250e-03 : f32
      %236 = vector.broadcast %cst_51 : f32 to vector<1x128xf32>
      %237 = arith.mulf %234, %236 : vector<1x128xf32>
      %cst_52 = arith.constant 3.906250e-03 : f32
      %238 = vector.broadcast %cst_52 : f32 to vector<1x128xf32>
      %239 = arith.mulf %235, %238 : vector<1x128xf32>
      %240 = arith.mulf %237, %237 : vector<1x128xf32>
      %241 = arith.subf %239, %240 : vector<1x128xf32>
      %cst_53 = arith.constant 0.000000e+00 : f32
      %242 = vector.broadcast %cst_53 : f32 to vector<1x128xf32>
      %243 = arith.maximumf %241, %242 : vector<1x128xf32>
      %cst_54 = arith.constant 9.99999974E-6 : f32
      %244 = vector.broadcast %cst_54 : f32 to vector<1x128xf32>
      %245 = arith.addf %243, %244 : vector<1x128xf32>
      %246 = math.rsqrt %245 : vector<1x128xf32>
      %247 = arith.mulf %205, %246 : vector<1x128xf32>
      %248 = arith.addf %217, %237 : vector<1x128xf32>
      %249 = arith.mulf %248, %247 : vector<1x128xf32>
      %250 = arith.subf %206, %249 : vector<1x128xf32>
      %c0_i32_55 = arith.constant 0 : i32
      %c16_i32_56 = arith.constant 16 : i32
      %251 = arith.muli %c0_i32_55, %c16_i32_56 : i32
      %252 = tpu.assume_multiple %251, 16 : i32
      %253 = arith.index_cast %arg8 : i32 to index
      %254 = arith.index_cast %252 : i32 to index
      %c0_57 = arith.constant 0 : index
      %255 = vector.load %arg7[%253, %254, %c0_57] : memref<2x16x128xf32, #tpu.memory_space<vmem>>, vector<1x16x128xf32>
      %256 = vector.shape_cast %255 : vector<1x16x128xf32> to vector<16x128xf32>
      %257 = vector.broadcast %247 : vector<1x128xf32> to vector<16x128xf32>
      %258 = arith.mulf %256, %257 : vector<16x128xf32>
      %259 = vector.broadcast %250 : vector<1x128xf32> to vector<16x128xf32>
      %260 = arith.addf %258, %259 : vector<16x128xf32>
      %261 = arith.truncf %260 : vector<16x128xf32> to vector<16x128xbf16>
      %cst_58 = arith.constant dense<0.000000e+00> : vector<16x256xf32>
      %262 = tpu.matmul %261, %1, %cst_58 {dimension_numbers = #tpu.dot_dimension_numbers<[1], [0], [0], [1], [0, 0, 1, 1], [], []>} : vector<16x128xbf16>, vector<128x256xbf16>, vector<16x256xf32> -> vector<16x256xf32>
      %263 = vector.shape_cast %4 : vector<256xf32> to vector<1x256xf32>
      %264 = vector.broadcast %263 : vector<1x256xf32> to vector<16x256xf32>
      %265 = arith.addf %262, %264 : vector<16x256xf32>
      %cst_59 = arith.constant 5.000000e-01 : f32
      %266 = vector.broadcast %cst_59 : f32 to vector<16x256xf32>
      %267 = arith.mulf %266, %265 : vector<16x256xf32>
      %cst_60 = arith.constant 4.471500e-02 : f32
      %268 = vector.broadcast %cst_60 : f32 to vector<16x256xf32>
      %269 = arith.mulf %268, %265 : vector<16x256xf32>
      %270 = arith.mulf %269, %265 : vector<16x256xf32>
      %271 = arith.mulf %270, %265 : vector<16x256xf32>
      %272 = arith.addf %265, %271 : vector<16x256xf32>
      %cst_61 = arith.constant 0.797884583 : f32
      %273 = vector.broadcast %cst_61 : f32 to vector<16x256xf32>
      %274 = arith.mulf %273, %272 : vector<16x256xf32>
      %275 = math.tanh %274 : vector<16x256xf32>
      %cst_62 = arith.constant 1.000000e+00 : f32
      %276 = vector.broadcast %cst_62 : f32 to vector<16x256xf32>
      %277 = arith.addf %276, %275 : vector<16x256xf32>
      %278 = arith.mulf %267, %277 : vector<16x256xf32>
      %279 = arith.truncf %278 : vector<16x256xf32> to vector<16x256xbf16>
      %cst_63 = arith.constant dense<0.000000e+00> : vector<16x128xf32>
      %280 = tpu.matmul %279, %2, %cst_63 {dimension_numbers = #tpu.dot_dimension_numbers<[1], [0], [0], [1], [0, 0, 1, 1], [], []>} : vector<16x256xbf16>, vector<256x128xbf16>, vector<16x128xf32> -> vector<16x128xf32>
      %281 = vector.shape_cast %6 : vector<128xf32> to vector<1x128xf32>
      %282 = vector.broadcast %281 : vector<1x128xf32> to vector<16x128xf32>
      %283 = arith.addf %280, %282 : vector<16x128xf32>
      %284 = arith.addf %256, %283 : vector<16x128xf32>
      %285 = arith.index_cast %arg8 : i32 to index
      %286 = arith.index_cast %252 : i32 to index
      %c0_64 = arith.constant 0 : index
      %287 = vector.load %arg7[%285, %286, %c0_64] : memref<2x16x128xf32, #tpu.memory_space<vmem>>, vector<1x16x128xf32>
      %288 = vector.shape_cast %287 : vector<1x16x128xf32> to vector<16x128xf32>
      %289 = vector.shape_cast %284 : vector<16x128xf32> to vector<1x16x128xf32>
      tpu.vector_store %arg7[%285, %286, %c0_64], %289 {strides = array<i32>} : memref<2x16x128xf32, #tpu.memory_space<vmem>>, vector<1x16x128xf32>,
      %c1_i32_65 = arith.constant 1 : i32
    }
    %c2_i32_9 = arith.constant 2 : i32
    return
  }
  func.func @transform_0(%arg0: i32) -> (i32, i32, i32) {
    %c0_i32 = arith.constant 0 : i32
    %c0_i32_0 = arith.constant 0 : i32
    %c0_i32_1 = arith.constant 0 : i32
    return %arg0, %c0_i32, %c0_i32_0 : i32, i32, i32
  }
  func.func @transform_1(%arg0: i32) -> (i32, i32, i32) {
    %c0_i32 = arith.constant 0 : i32
    %c0_i32_0 = arith.constant 0 : i32
    %c0_i32_1 = arith.constant 0 : i32
    return %arg0, %c0_i32, %c0_i32_0 : i32, i32, i32
  }
  func.func @transform_2(%arg0: i32) -> (i32, i32, i32) {
    %c0_i32 = arith.constant 0 : i32
    %c0_i32_0 = arith.constant 0 : i32
    %c0_i32_1 = arith.constant 0 : i32
    %c0_i32_2 = arith.constant 0 : i32
    return %c0_i32, %c0_i32_0, %c0_i32_1 : i32, i32, i32
  }
  func.func @transform_3(%arg0: i32) -> (i32, i32) {
    %c0_i32 = arith.constant 0 : i32
    %c0_i32_0 = arith.constant 0 : i32
    %c0_i32_1 = arith.constant 0 : i32
    return %c0_i32, %c0_i32_0 : i32, i32
  }
  func.func @transform_4(%arg0: i32) -> (i32, i32) {
    %c0_i32 = arith.constant 0 : i32
    %c0_i32_0 = arith.constant 0 : i32
    %c0_i32_1 = arith.constant 0 : i32
    return %c0_i32, %c0_i32_0 : i32, i32
  }
  func.func @transform_5(%arg0: i32) -> (i32, i32) {
    %c0_i32 = arith.constant 0 : i32
    %c0_i32_0 = arith.constant 0 : i32
    %c0_i32_1 = arith.constant 0 : i32
    return %c0_i32, %c0_i32_0 : i32, i32
  }
  func.func @transform_6(%arg0: i32) -> (i32, i32, i32) {
    %c0_i32 = arith.constant 0 : i32
    %c0_i32_0 = arith.constant 0 : i32
    %c0_i32_1 = arith.constant 0 : i32
    return %arg0, %c0_i32, %c0_i32_0 : i32, i32, i32
  }
}

module attributes {stable_mosaic.version = 11 : i64} {
  func.func @kernel(%arg0: i32, %arg1: memref<2x16x128xf32, #tpu.memory_space<vmem>>, %arg2: memref<2x4x128xf32, #tpu.memory_space<vmem>>, %arg3: memref<2x10x128xf32, #tpu.memory_space<vmem>>, %arg4: memref<128x256xbf16, #tpu.memory_space<vmem>>, %arg5: memref<256x128xbf16, #tpu.memory_space<vmem>>, %arg6: memref<2x256xf32, #tpu.memory_space<vmem>>, %arg7: memref<2x16x128xf32, #tpu.memory_space<vmem>>) attributes {dimension_semantics = [#tpu.dimension_semantics<parallel>], iteration_bounds = array<i64: 1>, scalar_prefetch = 0 : i64, scratch_operands = 0 : i64, tpu.core_type = #tpu.core_type<tc>, window_params = [{transform_indices = @transform_0, window_bounds = array<i64: 2, 16, 128>}, {transform_indices = @transform_1, window_bounds = array<i64: 2, 4, 128>}, {pipeline_mode = #tpu.pipeline_mode<synchronous>, transform_indices = @transform_2, window_bounds = array<i64: 2, 10, 128>}, {pipeline_mode = #tpu.pipeline_mode<synchronous>, transform_indices = @transform_3, window_bounds = array<i64: 128, 256>}, {pipeline_mode = #tpu.pipeline_mode<synchronous>, transform_indices = @transform_4, window_bounds = array<i64: 256, 128>}, {pipeline_mode = #tpu.pipeline_mode<synchronous>, transform_indices = @transform_5, window_bounds = array<i64: 2, 256>}, {transform_indices = @transform_6, window_bounds = array<i64: 2, 16, 128>}]} {
    %c0 = arith.constant 0 : index
    %c0_0 = arith.constant 0 : index
    %c0_1 = arith.constant 0 : index
    %0 = vector.load %arg3[%c0, %c0_0, %c0_1] : memref<2x10x128xf32, #tpu.memory_space<vmem>>, vector<2x10x128xf32>
    %c0_2 = arith.constant 0 : index
    %c0_3 = arith.constant 0 : index
    %1 = vector.load %arg4[%c0_2, %c0_3] : memref<128x256xbf16, #tpu.memory_space<vmem>>, vector<128x256xbf16>
    %c0_4 = arith.constant 0 : index
    %c0_5 = arith.constant 0 : index
    %2 = vector.load %arg5[%c0_4, %c0_5] : memref<256x128xbf16, #tpu.memory_space<vmem>>, vector<256x128xbf16>
    %c0_6 = arith.constant 0 : index
    %c0_7 = arith.constant 0 : index
    %3 = vector.load %arg6[%c0_6, %c0_7] : memref<2x256xf32, #tpu.memory_space<vmem>>, vector<1x256xf32>
    %4 = vector.shape_cast %3 : vector<1x256xf32> to vector<256xf32>
    %c1 = arith.constant 1 : index
    %c0_8 = arith.constant 0 : index
    %5 = vector.load %arg6[%c1, %c0_8] : memref<2x256xf32, #tpu.memory_space<vmem>>, vector<1x128xf32>
    %6 = vector.shape_cast %5 : vector<1x128xf32> to vector<128xf32>
    %c0_i32 = arith.constant 0 : i32
    %c2_i32 = arith.constant 2 : i32
    %7 = arith.addi %c0_i32, %c2_i32 : i32
    %c1_i32 = arith.constant 1 : i32
    scf.for %arg8 = %c0_i32 to %7 step %c1_i32  : i32 {
      %8 = arith.index_cast %arg8 : i32 to index
      %c0_10 = arith.constant 0 : index
      %c0_11 = arith.constant 0 : index
      %9 = vector.load %arg1[%8, %c0_10, %c0_11] : memref<2x16x128xf32, #tpu.memory_space<vmem>>, vector<1x16x128xf32>
      %10 = vector.shape_cast %9 : vector<1x16x128xf32> to vector<16x128xf32>
      %11 = arith.index_cast %arg8 : i32 to index
      %c0_12 = arith.constant 0 : index
      %c0_13 = arith.constant 0 : index
      %12 = vector.load %arg2[%11, %c0_12, %c0_13] : memref<2x4x128xf32, #tpu.memory_space<vmem>>, vector<1x4x128xf32>
      %13 = vector.shape_cast %12 : vector<1x4x128xf32> to vector<4x128xf32>
      %14 = vector.extract_strided_slice %13 {offsets = [0, 0], sizes = [1, 128], strides = [1, 1]} : vector<4x128xf32> to vector<1x128xf32>
      %15 = vector.extract_strided_slice %13 {offsets = [1, 0], sizes = [1, 128], strides = [1, 1]} : vector<4x128xf32> to vector<1x128xf32>
      %16 = vector.extract_strided_slice %10 {offsets = [0, 0], sizes = [1, 128], strides = [1, 1]} : vector<16x128xf32> to vector<1x128xf32>
      %c8_i32 = arith.constant 8 : i32
      %17 = tpu.dynamic_rotate %16 by %c8_i32 dim 1 : vector<1x128xf32>, i32 -> vector<1x128xf32>
      %18 = arith.addf %16, %17 : vector<1x128xf32>
      %c16_i32 = arith.constant 16 : i32
      %19 = tpu.dynamic_rotate %18 by %c16_i32 dim 1 : vector<1x128xf32>, i32 -> vector<1x128xf32>
      %20 = arith.addf %18, %19 : vector<1x128xf32>
      %c32_i32 = arith.constant 32 : i32
      %21 = tpu.dynamic_rotate %20 by %c32_i32 dim 1 : vector<1x128xf32>, i32 -> vector<1x128xf32>
      %22 = arith.addf %20, %21 : vector<1x128xf32>
      %c64_i32 = arith.constant 64 : i32
      %23 = tpu.dynamic_rotate %22 by %c64_i32 dim 1 : vector<1x128xf32>, i32 -> vector<1x128xf32>
      %24 = arith.addf %22, %23 : vector<1x128xf32>
      %cst = arith.constant 6.250000e-02 : f32
      %25 = vector.broadcast %cst : f32 to vector<1x128xf32>
      %26 = arith.mulf %24, %25 : vector<1x128xf32>
      %27 = vector.broadcast %26 : vector<1x128xf32> to vector<16x128xf32>
      %28 = arith.subf %10, %27 : vector<16x128xf32>
      %cst_14 = arith.constant dense<0.000000e+00> : vector<128xf32>
      %29 = vector.multi_reduction <add>, %28, %cst_14 [0] : vector<16x128xf32> to vector<128xf32>
      %30 = vector.shape_cast %29 : vector<128xf32> to vector<1x128xf32>
      %31 = arith.mulf %28, %28 : vector<16x128xf32>
      %cst_15 = arith.constant dense<0.000000e+00> : vector<128xf32>
      %32 = vector.multi_reduction <add>, %31, %cst_15 [0] : vector<16x128xf32> to vector<128xf32>
      %33 = vector.shape_cast %32 : vector<128xf32> to vector<1x128xf32>
      %c8_i32_16 = arith.constant 8 : i32
      %34 = tpu.dynamic_rotate %30 by %c8_i32_16 dim 1 : vector<1x128xf32>, i32 -> vector<1x128xf32>
      %35 = arith.addf %30, %34 : vector<1x128xf32>
      %c16_i32_17 = arith.constant 16 : i32
      %36 = tpu.dynamic_rotate %35 by %c16_i32_17 dim 1 : vector<1x128xf32>, i32 -> vector<1x128xf32>
      %37 = arith.addf %35, %36 : vector<1x128xf32>
      %c32_i32_18 = arith.constant 32 : i32
      %38 = tpu.dynamic_rotate %37 by %c32_i32_18 dim 1 : vector<1x128xf32>, i32 -> vector<1x128xf32>
      %39 = arith.addf %37, %38 : vector<1x128xf32>
      %c64_i32_19 = arith.constant 64 : i32
      %40 = tpu.dynamic_rotate %39 by %c64_i32_19 dim 1 : vector<1x128xf32>, i32 -> vector<1x128xf32>
      %41 = arith.addf %39, %40 : vector<1x128xf32>
      %c8_i32_20 = arith.constant 8 : i32
      %42 = tpu.dynamic_rotate %33 by %c8_i32_20 dim 1 : vector<1x128xf32>, i32 -> vector<1x128xf32>
      %43 = arith.addf %33, %42 : vector<1x128xf32>
      %c16_i32_21 = arith.constant 16 : i32
      %44 = tpu.dynamic_rotate %43 by %c16_i32_21 dim 1 : vector<1x128xf32>, i32 -> vector<1x128xf32>
      %45 = arith.addf %43, %44 : vector<1x128xf32>
      %c32_i32_22 = arith.constant 32 : i32
      %46 = tpu.dynamic_rotate %45 by %c32_i32_22 dim 1 : vector<1x128xf32>, i32 -> vector<1x128xf32>
      %47 = arith.addf %45, %46 : vector<1x128xf32>
      %c64_i32_23 = arith.constant 64 : i32
      %48 = tpu.dynamic_rotate %47 by %c64_i32_23 dim 1 : vector<1x128xf32>, i32 -> vector<1x128xf32>
      %49 = arith.addf %47, %48 : vector<1x128xf32>
      %cst_24 = arith.constant 3.906250e-03 : f32
      %50 = vector.broadcast %cst_24 : f32 to vector<1x128xf32>
      %51 = arith.mulf %41, %50 : vector<1x128xf32>
      %cst_25 = arith.constant 3.906250e-03 : f32
      %52 = vector.broadcast %cst_25 : f32 to vector<1x128xf32>
      %53 = arith.mulf %49, %52 : vector<1x128xf32>
      %54 = arith.mulf %51, %51 : vector<1x128xf32>
      %55 = arith.subf %53, %54 : vector<1x128xf32>
      %cst_26 = arith.constant 0.000000e+00 : f32
      %56 = vector.broadcast %cst_26 : f32 to vector<1x128xf32>
      %57 = arith.maximumf %55, %56 : vector<1x128xf32>
      %cst_27 = arith.constant 9.99999974E-6 : f32
      %58 = vector.broadcast %cst_27 : f32 to vector<1x128xf32>
      %59 = arith.addf %57, %58 : vector<1x128xf32>
      %60 = math.rsqrt %59 : vector<1x128xf32>
      %61 = arith.mulf %14, %60 : vector<1x128xf32>
      %62 = arith.addf %26, %51 : vector<1x128xf32>
      %63 = arith.mulf %62, %61 : vector<1x128xf32>
      %64 = arith.subf %15, %63 : vector<1x128xf32>
      %65 = vector.broadcast %61 : vector<1x128xf32> to vector<16x128xf32>
      %66 = arith.mulf %10, %65 : vector<16x128xf32>
      %67 = vector.broadcast %64 : vector<1x128xf32> to vector<16x128xf32>
      %68 = arith.addf %66, %67 : vector<16x128xf32>
      %69 = vector.extract_strided_slice %0 {offsets = [0, 0, 0], sizes = [1, 10, 128], strides = [1, 1, 1]} : vector<2x10x128xf32> to vector<1x10x128xf32>
      %70 = vector.shape_cast %69 : vector<1x10x128xf32> to vector<10x128xf32>
      %c1_i32_28 = arith.constant 1 : i32
      %71 = tpu.dynamic_rotate %68 by %c1_i32_28 dim 0 : vector<16x128xf32>, i32 -> vector<16x128xf32>
      %c8_i32_29 = arith.constant 8 : i32
      %72 = tpu.dynamic_rotate %71 by %c8_i32_29 dim 1 : vector<16x128xf32>, i32 -> vector<16x128xf32>
      %73 = vector.extract_strided_slice %70 {offsets = [0, 0], sizes = [1, 128], strides = [1, 1]} : vector<10x128xf32> to vector<1x128xf32>
      %74 = vector.shape_cast %73 : vector<1x128xf32> to vector<128xf32>
      %75 = vector.shape_cast %74 : vector<128xf32> to vector<1x128xf32>
      %76 = vector.broadcast %75 : vector<1x128xf32> to vector<16x128xf32>
      %77 = arith.mulf %72, %76 : vector<16x128xf32>
      %78 = vector.extract_strided_slice %70 {offsets = [1, 0], sizes = [1, 128], strides = [1, 1]} : vector<10x128xf32> to vector<1x128xf32>
      %79 = vector.shape_cast %78 : vector<1x128xf32> to vector<128xf32>
      %80 = vector.shape_cast %79 : vector<128xf32> to vector<1x128xf32>
      %81 = vector.broadcast %80 : vector<1x128xf32> to vector<16x128xf32>
      %82 = arith.mulf %71, %81 : vector<16x128xf32>
      %83 = arith.addf %77, %82 : vector<16x128xf32>
      %c120_i32 = arith.constant 120 : i32
      %84 = tpu.dynamic_rotate %71 by %c120_i32 dim 1 : vector<16x128xf32>, i32 -> vector<16x128xf32>
      %85 = vector.extract_strided_slice %70 {offsets = [2, 0], sizes = [1, 128], strides = [1, 1]} : vector<10x128xf32> to vector<1x128xf32>
      %86 = vector.shape_cast %85 : vector<1x128xf32> to vector<128xf32>
      %87 = vector.shape_cast %86 : vector<128xf32> to vector<1x128xf32>
      %88 = vector.broadcast %87 : vector<1x128xf32> to vector<16x128xf32>
      %89 = arith.mulf %84, %88 : vector<16x128xf32>
      %90 = arith.addf %83, %89 : vector<16x128xf32>
      %c8_i32_30 = arith.constant 8 : i32
      %91 = tpu.dynamic_rotate %68 by %c8_i32_30 dim 1 : vector<16x128xf32>, i32 -> vector<16x128xf32>
      %92 = vector.extract_strided_slice %70 {offsets = [3, 0], sizes = [1, 128], strides = [1, 1]} : vector<10x128xf32> to vector<1x128xf32>
      %93 = vector.shape_cast %92 : vector<1x128xf32> to vector<128xf32>
      %94 = vector.shape_cast %93 : vector<128xf32> to vector<1x128xf32>
      %95 = vector.broadcast %94 : vector<1x128xf32> to vector<16x128xf32>
      %96 = arith.mulf %91, %95 : vector<16x128xf32>
      %97 = arith.addf %90, %96 : vector<16x128xf32>
      %98 = vector.extract_strided_slice %70 {offsets = [4, 0], sizes = [1, 128], strides = [1, 1]} : vector<10x128xf32> to vector<1x128xf32>
      %99 = vector.shape_cast %98 : vector<1x128xf32> to vector<128xf32>
      %100 = vector.shape_cast %99 : vector<128xf32> to vector<1x128xf32>
      %101 = vector.broadcast %100 : vector<1x128xf32> to vector<16x128xf32>
      %102 = arith.mulf %68, %101 : vector<16x128xf32>
      %103 = arith.addf %97, %102 : vector<16x128xf32>
      %c120_i32_31 = arith.constant 120 : i32
      %104 = tpu.dynamic_rotate %68 by %c120_i32_31 dim 1 : vector<16x128xf32>, i32 -> vector<16x128xf32>
      %105 = vector.extract_strided_slice %70 {offsets = [5, 0], sizes = [1, 128], strides = [1, 1]} : vector<10x128xf32> to vector<1x128xf32>
      %106 = vector.shape_cast %105 : vector<1x128xf32> to vector<128xf32>
      %107 = vector.shape_cast %106 : vector<128xf32> to vector<1x128xf32>
      %108 = vector.broadcast %107 : vector<1x128xf32> to vector<16x128xf32>
      %109 = arith.mulf %104, %108 : vector<16x128xf32>
      %110 = arith.addf %103, %109 : vector<16x128xf32>
      %c15_i32 = arith.constant 15 : i32
      %111 = tpu.dynamic_rotate %68 by %c15_i32 dim 0 : vector<16x128xf32>, i32 -> vector<16x128xf32>
      %c8_i32_32 = arith.constant 8 : i32
      %112 = tpu.dynamic_rotate %111 by %c8_i32_32 dim 1 : vector<16x128xf32>, i32 -> vector<16x128xf32>
      %113 = vector.extract_strided_slice %70 {offsets = [6, 0], sizes = [1, 128], strides = [1, 1]} : vector<10x128xf32> to vector<1x128xf32>
      %114 = vector.shape_cast %113 : vector<1x128xf32> to vector<128xf32>
      %115 = vector.shape_cast %114 : vector<128xf32> to vector<1x128xf32>
      %116 = vector.broadcast %115 : vector<1x128xf32> to vector<16x128xf32>
      %117 = arith.mulf %112, %116 : vector<16x128xf32>
      %118 = arith.addf %110, %117 : vector<16x128xf32>
      %119 = vector.extract_strided_slice %70 {offsets = [7, 0], sizes = [1, 128], strides = [1, 1]} : vector<10x128xf32> to vector<1x128xf32>
      %120 = vector.shape_cast %119 : vector<1x128xf32> to vector<128xf32>
      %121 = vector.shape_cast %120 : vector<128xf32> to vector<1x128xf32>
      %122 = vector.broadcast %121 : vector<1x128xf32> to vector<16x128xf32>
      %123 = arith.mulf %111, %122 : vector<16x128xf32>
      %124 = arith.addf %118, %123 : vector<16x128xf32>
      %c120_i32_33 = arith.constant 120 : i32
      %125 = tpu.dynamic_rotate %111 by %c120_i32_33 dim 1 : vector<16x128xf32>, i32 -> vector<16x128xf32>
      %126 = vector.extract_strided_slice %70 {offsets = [8, 0], sizes = [1, 128], strides = [1, 1]} : vector<10x128xf32> to vector<1x128xf32>
      %127 = vector.shape_cast %126 : vector<1x128xf32> to vector<128xf32>
      %128 = vector.shape_cast %127 : vector<128xf32> to vector<1x128xf32>
      %129 = vector.broadcast %128 : vector<1x128xf32> to vector<16x128xf32>
      %130 = arith.mulf %125, %129 : vector<16x128xf32>
      %131 = arith.addf %124, %130 : vector<16x128xf32>
      %132 = vector.extract_strided_slice %70 {offsets = [9, 0], sizes = [1, 128], strides = [1, 1]} : vector<10x128xf32> to vector<1x128xf32>
      %133 = vector.shape_cast %132 : vector<1x128xf32> to vector<128xf32>
      %134 = vector.shape_cast %133 : vector<128xf32> to vector<1x128xf32>
      %135 = vector.broadcast %134 : vector<1x128xf32> to vector<16x128xf32>
      %136 = arith.addf %131, %135 : vector<16x128xf32>
      %137 = vector.extract_strided_slice %0 {offsets = [1, 0, 0], sizes = [1, 10, 128], strides = [1, 1, 1]} : vector<2x10x128xf32> to vector<1x10x128xf32>
      %138 = vector.shape_cast %137 : vector<1x10x128xf32> to vector<10x128xf32>
      %c1_i32_34 = arith.constant 1 : i32
      %139 = tpu.dynamic_rotate %136 by %c1_i32_34 dim 0 : vector<16x128xf32>, i32 -> vector<16x128xf32>
      %c8_i32_35 = arith.constant 8 : i32
      %140 = tpu.dynamic_rotate %139 by %c8_i32_35 dim 1 : vector<16x128xf32>, i32 -> vector<16x128xf32>
      %141 = vector.extract_strided_slice %138 {offsets = [0, 0], sizes = [1, 128], strides = [1, 1]} : vector<10x128xf32> to vector<1x128xf32>
      %142 = vector.shape_cast %141 : vector<1x128xf32> to vector<128xf32>
      %143 = vector.shape_cast %142 : vector<128xf32> to vector<1x128xf32>
      %144 = vector.broadcast %143 : vector<1x128xf32> to vector<16x128xf32>
      %145 = arith.mulf %140, %144 : vector<16x128xf32>
      %146 = vector.extract_strided_slice %138 {offsets = [1, 0], sizes = [1, 128], strides = [1, 1]} : vector<10x128xf32> to vector<1x128xf32>
      %147 = vector.shape_cast %146 : vector<1x128xf32> to vector<128xf32>
      %148 = vector.shape_cast %147 : vector<128xf32> to vector<1x128xf32>
      %149 = vector.broadcast %148 : vector<1x128xf32> to vector<16x128xf32>
      %150 = arith.mulf %139, %149 : vector<16x128xf32>
      %151 = arith.addf %145, %150 : vector<16x128xf32>
      %c120_i32_36 = arith.constant 120 : i32
      %152 = tpu.dynamic_rotate %139 by %c120_i32_36 dim 1 : vector<16x128xf32>, i32 -> vector<16x128xf32>
      %153 = vector.extract_strided_slice %138 {offsets = [2, 0], sizes = [1, 128], strides = [1, 1]} : vector<10x128xf32> to vector<1x128xf32>
      %154 = vector.shape_cast %153 : vector<1x128xf32> to vector<128xf32>
      %155 = vector.shape_cast %154 : vector<128xf32> to vector<1x128xf32>
      %156 = vector.broadcast %155 : vector<1x128xf32> to vector<16x128xf32>
      %157 = arith.mulf %152, %156 : vector<16x128xf32>
      %158 = arith.addf %151, %157 : vector<16x128xf32>
      %c8_i32_37 = arith.constant 8 : i32
      %159 = tpu.dynamic_rotate %136 by %c8_i32_37 dim 1 : vector<16x128xf32>, i32 -> vector<16x128xf32>
      %160 = vector.extract_strided_slice %138 {offsets = [3, 0], sizes = [1, 128], strides = [1, 1]} : vector<10x128xf32> to vector<1x128xf32>
      %161 = vector.shape_cast %160 : vector<1x128xf32> to vector<128xf32>
      %162 = vector.shape_cast %161 : vector<128xf32> to vector<1x128xf32>
      %163 = vector.broadcast %162 : vector<1x128xf32> to vector<16x128xf32>
      %164 = arith.mulf %159, %163 : vector<16x128xf32>
      %165 = arith.addf %158, %164 : vector<16x128xf32>
      %166 = vector.extract_strided_slice %138 {offsets = [4, 0], sizes = [1, 128], strides = [1, 1]} : vector<10x128xf32> to vector<1x128xf32>
      %167 = vector.shape_cast %166 : vector<1x128xf32> to vector<128xf32>
      %168 = vector.shape_cast %167 : vector<128xf32> to vector<1x128xf32>
      %169 = vector.broadcast %168 : vector<1x128xf32> to vector<16x128xf32>
      %170 = arith.mulf %136, %169 : vector<16x128xf32>
      %171 = arith.addf %165, %170 : vector<16x128xf32>
      %c120_i32_38 = arith.constant 120 : i32
      %172 = tpu.dynamic_rotate %136 by %c120_i32_38 dim 1 : vector<16x128xf32>, i32 -> vector<16x128xf32>
      %173 = vector.extract_strided_slice %138 {offsets = [5, 0], sizes = [1, 128], strides = [1, 1]} : vector<10x128xf32> to vector<1x128xf32>
      %174 = vector.shape_cast %173 : vector<1x128xf32> to vector<128xf32>
      %175 = vector.shape_cast %174 : vector<128xf32> to vector<1x128xf32>
      %176 = vector.broadcast %175 : vector<1x128xf32> to vector<16x128xf32>
      %177 = arith.mulf %172, %176 : vector<16x128xf32>
      %178 = arith.addf %171, %177 : vector<16x128xf32>
      %c15_i32_39 = arith.constant 15 : i32
      %179 = tpu.dynamic_rotate %136 by %c15_i32_39 dim 0 : vector<16x128xf32>, i32 -> vector<16x128xf32>
      %c8_i32_40 = arith.constant 8 : i32
      %180 = tpu.dynamic_rotate %179 by %c8_i32_40 dim 1 : vector<16x128xf32>, i32 -> vector<16x128xf32>
      %181 = vector.extract_strided_slice %138 {offsets = [6, 0], sizes = [1, 128], strides = [1, 1]} : vector<10x128xf32> to vector<1x128xf32>
      %182 = vector.shape_cast %181 : vector<1x128xf32> to vector<128xf32>
      %183 = vector.shape_cast %182 : vector<128xf32> to vector<1x128xf32>
      %184 = vector.broadcast %183 : vector<1x128xf32> to vector<16x128xf32>
      %185 = arith.mulf %180, %184 : vector<16x128xf32>
      %186 = arith.addf %178, %185 : vector<16x128xf32>
      %187 = vector.extract_strided_slice %138 {offsets = [7, 0], sizes = [1, 128], strides = [1, 1]} : vector<10x128xf32> to vector<1x128xf32>
      %188 = vector.shape_cast %187 : vector<1x128xf32> to vector<128xf32>
      %189 = vector.shape_cast %188 : vector<128xf32> to vector<1x128xf32>
      %190 = vector.broadcast %189 : vector<1x128xf32> to vector<16x128xf32>
      %191 = arith.mulf %179, %190 : vector<16x128xf32>
      %192 = arith.addf %186, %191 : vector<16x128xf32>
      %c120_i32_41 = arith.constant 120 : i32
      %193 = tpu.dynamic_rotate %179 by %c120_i32_41 dim 1 : vector<16x128xf32>, i32 -> vector<16x128xf32>
      %194 = vector.extract_strided_slice %138 {offsets = [8, 0], sizes = [1, 128], strides = [1, 1]} : vector<10x128xf32> to vector<1x128xf32>
      %195 = vector.shape_cast %194 : vector<1x128xf32> to vector<128xf32>
      %196 = vector.shape_cast %195 : vector<128xf32> to vector<1x128xf32>
      %197 = vector.broadcast %196 : vector<1x128xf32> to vector<16x128xf32>
      %198 = arith.mulf %193, %197 : vector<16x128xf32>
      %199 = arith.addf %192, %198 : vector<16x128xf32>
      %200 = vector.extract_strided_slice %138 {offsets = [9, 0], sizes = [1, 128], strides = [1, 1]} : vector<10x128xf32> to vector<1x128xf32>
      %201 = vector.shape_cast %200 : vector<1x128xf32> to vector<128xf32>
      %202 = vector.shape_cast %201 : vector<128xf32> to vector<1x128xf32>
      %203 = vector.broadcast %202 : vector<1x128xf32> to vector<16x128xf32>
      %204 = arith.addf %199, %203 : vector<16x128xf32>
      %205 = arith.addf %10, %204 : vector<16x128xf32>
      %206 = arith.index_cast %arg8 : i32 to index
      %c0_42 = arith.constant 0 : index
      %c0_43 = arith.constant 0 : index
      %207 = vector.load %arg7[%206, %c0_42, %c0_43] : memref<2x16x128xf32, #tpu.memory_space<vmem>>, vector<1x16x128xf32>
      %208 = vector.shape_cast %207 : vector<1x16x128xf32> to vector<16x128xf32>
      %209 = vector.shape_cast %205 : vector<16x128xf32> to vector<1x16x128xf32>
      tpu.vector_store %arg7[%206, %c0_42, %c0_43], %209 {strides = array<i32>} : memref<2x16x128xf32, #tpu.memory_space<vmem>>, vector<1x16x128xf32>,
      %210 = vector.extract_strided_slice %13 {offsets = [2, 0], sizes = [1, 128], strides = [1, 1]} : vector<4x128xf32> to vector<1x128xf32>
      %211 = vector.extract_strided_slice %13 {offsets = [3, 0], sizes = [1, 128], strides = [1, 1]} : vector<4x128xf32> to vector<1x128xf32>
      %212 = vector.extract_strided_slice %205 {offsets = [0, 0], sizes = [1, 128], strides = [1, 1]} : vector<16x128xf32> to vector<1x128xf32>
      %c8_i32_44 = arith.constant 8 : i32
      %213 = tpu.dynamic_rotate %212 by %c8_i32_44 dim 1 : vector<1x128xf32>, i32 -> vector<1x128xf32>
      %214 = arith.addf %212, %213 : vector<1x128xf32>
      %c16_i32_45 = arith.constant 16 : i32
      %215 = tpu.dynamic_rotate %214 by %c16_i32_45 dim 1 : vector<1x128xf32>, i32 -> vector<1x128xf32>
      %216 = arith.addf %214, %215 : vector<1x128xf32>
      %c32_i32_46 = arith.constant 32 : i32
      %217 = tpu.dynamic_rotate %216 by %c32_i32_46 dim 1 : vector<1x128xf32>, i32 -> vector<1x128xf32>
      %218 = arith.addf %216, %217 : vector<1x128xf32>
      %c64_i32_47 = arith.constant 64 : i32
      %219 = tpu.dynamic_rotate %218 by %c64_i32_47 dim 1 : vector<1x128xf32>, i32 -> vector<1x128xf32>
      %220 = arith.addf %218, %219 : vector<1x128xf32>
      %cst_48 = arith.constant 6.250000e-02 : f32
      %221 = vector.broadcast %cst_48 : f32 to vector<1x128xf32>
      %222 = arith.mulf %220, %221 : vector<1x128xf32>
      %223 = vector.broadcast %222 : vector<1x128xf32> to vector<16x128xf32>
      %224 = arith.subf %205, %223 : vector<16x128xf32>
      %cst_49 = arith.constant dense<0.000000e+00> : vector<128xf32>
      %225 = vector.multi_reduction <add>, %224, %cst_49 [0] : vector<16x128xf32> to vector<128xf32>
      %226 = vector.shape_cast %225 : vector<128xf32> to vector<1x128xf32>
      %227 = arith.mulf %224, %224 : vector<16x128xf32>
      %cst_50 = arith.constant dense<0.000000e+00> : vector<128xf32>
      %228 = vector.multi_reduction <add>, %227, %cst_50 [0] : vector<16x128xf32> to vector<128xf32>
      %229 = vector.shape_cast %228 : vector<128xf32> to vector<1x128xf32>
      %c8_i32_51 = arith.constant 8 : i32
      %230 = tpu.dynamic_rotate %226 by %c8_i32_51 dim 1 : vector<1x128xf32>, i32 -> vector<1x128xf32>
      %231 = arith.addf %226, %230 : vector<1x128xf32>
      %c16_i32_52 = arith.constant 16 : i32
      %232 = tpu.dynamic_rotate %231 by %c16_i32_52 dim 1 : vector<1x128xf32>, i32 -> vector<1x128xf32>
      %233 = arith.addf %231, %232 : vector<1x128xf32>
      %c32_i32_53 = arith.constant 32 : i32
      %234 = tpu.dynamic_rotate %233 by %c32_i32_53 dim 1 : vector<1x128xf32>, i32 -> vector<1x128xf32>
      %235 = arith.addf %233, %234 : vector<1x128xf32>
      %c64_i32_54 = arith.constant 64 : i32
      %236 = tpu.dynamic_rotate %235 by %c64_i32_54 dim 1 : vector<1x128xf32>, i32 -> vector<1x128xf32>
      %237 = arith.addf %235, %236 : vector<1x128xf32>
      %c8_i32_55 = arith.constant 8 : i32
      %238 = tpu.dynamic_rotate %229 by %c8_i32_55 dim 1 : vector<1x128xf32>, i32 -> vector<1x128xf32>
      %239 = arith.addf %229, %238 : vector<1x128xf32>
      %c16_i32_56 = arith.constant 16 : i32
      %240 = tpu.dynamic_rotate %239 by %c16_i32_56 dim 1 : vector<1x128xf32>, i32 -> vector<1x128xf32>
      %241 = arith.addf %239, %240 : vector<1x128xf32>
      %c32_i32_57 = arith.constant 32 : i32
      %242 = tpu.dynamic_rotate %241 by %c32_i32_57 dim 1 : vector<1x128xf32>, i32 -> vector<1x128xf32>
      %243 = arith.addf %241, %242 : vector<1x128xf32>
      %c64_i32_58 = arith.constant 64 : i32
      %244 = tpu.dynamic_rotate %243 by %c64_i32_58 dim 1 : vector<1x128xf32>, i32 -> vector<1x128xf32>
      %245 = arith.addf %243, %244 : vector<1x128xf32>
      %cst_59 = arith.constant 3.906250e-03 : f32
      %246 = vector.broadcast %cst_59 : f32 to vector<1x128xf32>
      %247 = arith.mulf %237, %246 : vector<1x128xf32>
      %cst_60 = arith.constant 3.906250e-03 : f32
      %248 = vector.broadcast %cst_60 : f32 to vector<1x128xf32>
      %249 = arith.mulf %245, %248 : vector<1x128xf32>
      %250 = arith.mulf %247, %247 : vector<1x128xf32>
      %251 = arith.subf %249, %250 : vector<1x128xf32>
      %cst_61 = arith.constant 0.000000e+00 : f32
      %252 = vector.broadcast %cst_61 : f32 to vector<1x128xf32>
      %253 = arith.maximumf %251, %252 : vector<1x128xf32>
      %cst_62 = arith.constant 9.99999974E-6 : f32
      %254 = vector.broadcast %cst_62 : f32 to vector<1x128xf32>
      %255 = arith.addf %253, %254 : vector<1x128xf32>
      %256 = math.rsqrt %255 : vector<1x128xf32>
      %257 = arith.mulf %210, %256 : vector<1x128xf32>
      %258 = arith.addf %222, %247 : vector<1x128xf32>
      %259 = arith.mulf %258, %257 : vector<1x128xf32>
      %260 = arith.subf %211, %259 : vector<1x128xf32>
      %c0_i32_63 = arith.constant 0 : i32
      %c16_i32_64 = arith.constant 16 : i32
      %261 = arith.muli %c0_i32_63, %c16_i32_64 : i32
      %262 = tpu.assume_multiple %261, 16 : i32
      %263 = arith.index_cast %arg8 : i32 to index
      %264 = arith.index_cast %262 : i32 to index
      %c0_65 = arith.constant 0 : index
      %265 = vector.load %arg7[%263, %264, %c0_65] : memref<2x16x128xf32, #tpu.memory_space<vmem>>, vector<1x16x128xf32>
      %266 = vector.shape_cast %265 : vector<1x16x128xf32> to vector<16x128xf32>
      %267 = vector.broadcast %257 : vector<1x128xf32> to vector<16x128xf32>
      %268 = arith.mulf %266, %267 : vector<16x128xf32>
      %269 = vector.broadcast %260 : vector<1x128xf32> to vector<16x128xf32>
      %270 = arith.addf %268, %269 : vector<16x128xf32>
      %271 = arith.truncf %270 : vector<16x128xf32> to vector<16x128xbf16>
      %cst_66 = arith.constant dense<0.000000e+00> : vector<16x256xf32>
      %272 = tpu.matmul %271, %1, %cst_66 {dimension_numbers = #tpu.dot_dimension_numbers<[1], [0], [0], [1], [0, 0, 1, 1], [], []>} : vector<16x128xbf16>, vector<128x256xbf16>, vector<16x256xf32> -> vector<16x256xf32>
      %273 = vector.shape_cast %4 : vector<256xf32> to vector<1x256xf32>
      %274 = vector.broadcast %273 : vector<1x256xf32> to vector<16x256xf32>
      %275 = arith.addf %272, %274 : vector<16x256xf32>
      %cst_67 = arith.constant 5.000000e-01 : f32
      %276 = vector.broadcast %cst_67 : f32 to vector<16x256xf32>
      %277 = arith.mulf %276, %275 : vector<16x256xf32>
      %cst_68 = arith.constant 4.471500e-02 : f32
      %278 = vector.broadcast %cst_68 : f32 to vector<16x256xf32>
      %279 = arith.mulf %278, %275 : vector<16x256xf32>
      %280 = arith.mulf %279, %275 : vector<16x256xf32>
      %281 = arith.mulf %280, %275 : vector<16x256xf32>
      %282 = arith.addf %275, %281 : vector<16x256xf32>
      %cst_69 = arith.constant 0.797884583 : f32
      %283 = vector.broadcast %cst_69 : f32 to vector<16x256xf32>
      %284 = arith.mulf %283, %282 : vector<16x256xf32>
      %285 = math.tanh %284 : vector<16x256xf32>
      %cst_70 = arith.constant 1.000000e+00 : f32
      %286 = vector.broadcast %cst_70 : f32 to vector<16x256xf32>
      %287 = arith.addf %286, %285 : vector<16x256xf32>
      %288 = arith.mulf %277, %287 : vector<16x256xf32>
      %289 = arith.truncf %288 : vector<16x256xf32> to vector<16x256xbf16>
      %cst_71 = arith.constant dense<0.000000e+00> : vector<16x128xf32>
      %290 = tpu.matmul %289, %2, %cst_71 {dimension_numbers = #tpu.dot_dimension_numbers<[1], [0], [0], [1], [0, 0, 1, 1], [], []>} : vector<16x256xbf16>, vector<256x128xbf16>, vector<16x128xf32> -> vector<16x128xf32>
      %291 = vector.shape_cast %6 : vector<128xf32> to vector<1x128xf32>
      %292 = vector.broadcast %291 : vector<1x128xf32> to vector<16x128xf32>
      %293 = arith.addf %290, %292 : vector<16x128xf32>
      %294 = arith.addf %266, %293 : vector<16x128xf32>
      %295 = arith.index_cast %arg8 : i32 to index
      %296 = arith.index_cast %262 : i32 to index
      %c0_72 = arith.constant 0 : index
      %297 = vector.load %arg7[%295, %296, %c0_72] : memref<2x16x128xf32, #tpu.memory_space<vmem>>, vector<1x16x128xf32>
      %298 = vector.shape_cast %297 : vector<1x16x128xf32> to vector<16x128xf32>
      %299 = vector.shape_cast %294 : vector<16x128xf32> to vector<1x16x128xf32>
      tpu.vector_store %arg7[%295, %296, %c0_72], %299 {strides = array<i32>} : memref<2x16x128xf32, #tpu.memory_space<vmem>>, vector<1x16x128xf32>,
      %c1_i32_73 = arith.constant 1 : i32
    }
    %c2_i32_9 = arith.constant 2 : i32
    return
  }
  func.func @transform_0(%arg0: i32) -> (i32, i32, i32) {
    %c0_i32 = arith.constant 0 : i32
    %c0_i32_0 = arith.constant 0 : i32
    %c0_i32_1 = arith.constant 0 : i32
    return %arg0, %c0_i32, %c0_i32_0 : i32, i32, i32
  }
  func.func @transform_1(%arg0: i32) -> (i32, i32, i32) {
    %c0_i32 = arith.constant 0 : i32
    %c0_i32_0 = arith.constant 0 : i32
    %c0_i32_1 = arith.constant 0 : i32
    return %arg0, %c0_i32, %c0_i32_0 : i32, i32, i32
  }
  func.func @transform_2(%arg0: i32) -> (i32, i32, i32) {
    %c0_i32 = arith.constant 0 : i32
    %c0_i32_0 = arith.constant 0 : i32
    %c0_i32_1 = arith.constant 0 : i32
    %c0_i32_2 = arith.constant 0 : i32
    return %c0_i32, %c0_i32_0, %c0_i32_1 : i32, i32, i32
  }
  func.func @transform_3(%arg0: i32) -> (i32, i32) {
    %c0_i32 = arith.constant 0 : i32
    %c0_i32_0 = arith.constant 0 : i32
    %c0_i32_1 = arith.constant 0 : i32
    return %c0_i32, %c0_i32_0 : i32, i32
  }
  func.func @transform_4(%arg0: i32) -> (i32, i32) {
    %c0_i32 = arith.constant 0 : i32
    %c0_i32_0 = arith.constant 0 : i32
    %c0_i32_1 = arith.constant 0 : i32
    return %c0_i32, %c0_i32_0 : i32, i32
  }
  func.func @transform_5(%arg0: i32) -> (i32, i32) {
    %c0_i32 = arith.constant 0 : i32
    %c0_i32_0 = arith.constant 0 : i32
    %c0_i32_1 = arith.constant 0 : i32
    return %c0_i32, %c0_i32_0 : i32, i32
  }
  func.func @transform_6(%arg0: i32) -> (i32, i32, i32) {
    %c0_i32 = arith.constant 0 : i32
    %c0_i32_0 = arith.constant 0 : i32
    %c0_i32_1 = arith.constant 0 : i32
    return %arg0, %c0_i32, %c0_i32_0 : i32, i32, i32
  }
}

</mosaic_0001>

<llo_original>
// kernel: tpu_custom_call.1
$region0: #{tpu_custom_call.1}
  #allocation0 [shape = 'u32[]', space=smem, size = 0x4, offset = 0x4, fixed_abs, tag = 'smem constant byte address 0x4 - core index']
  #allocation1 [shape = 'u32[72,128]{1,0:T(1,128)}', space=vmem, size = 0x9000, scoped, tag = 'internal scratch']
  %s0 = inlined_call_operand.vmem [shape: f32[2,16,128], index: 0, kind: input, shape index: {}]
  %s1 = inlined_call_operand.vmem [shape: f32[2,4,128], index: 1, kind: input, shape index: {}]
  %s2 = inlined_call_operand.vmem [shape: f32[2,10,128], index: 2, kind: input, shape index: {}]
  %s3 = inlined_call_operand.hbm [shape: bf16[128,256], index: 3, kind: input, shape index: {}]
  %s4 = inlined_call_operand.hbm [shape: bf16[256,128], index: 4, kind: input, shape index: {}]
  %s5 = inlined_call_operand.vmem [shape: f32[2,256], index: 5, kind: input, shape index: {}]
  %s6 = inlined_call_operand.hbm [shape: f32[2,16,128], index: 6, kind: output, shape index: {}]
  %s7 = sld [smem:[#allocation0]]
  $region49: #{tpu_custom_call.1} parent=0
    _
  %s9 = ssub.s32 1, %s7
  %s10 = scalar_select 0, %s9, %s7
  $region1: #{tpu_custom_call.1} parent=0
    #allocation2 [shape = 'u8[65536]{0}', space=vmem, size = 0x10000, scoped, tag = 'input window, operand 3, single buffered']
    #allocation3 [shape = 's32[1]{0}', space=sflag, size = 0x4, scoped, tag = 'scoped memory for tpu_custom_call.1']
    #allocation4 [shape = 's32[1]{0}', space=sflag, size = 0x4, scoped, tag = 'scoped memory for tpu_custom_call.1']
    #allocation5 [shape = 'u8[65536]{0}', space=vmem, size = 0x10000, scoped, tag = 'input window, operand 4, single buffered']
    #allocation6 [shape = 's32[1]{0}', space=sflag, size = 0x4, scoped, tag = 'scoped memory for tpu_custom_call.1']
    #allocation7 [shape = 'u8[16384]{0}', space=vmem, size = 0x4000, scoped, tag = 'output window, operand 0, single buffered']
    %11 = vsyncpa [#allocation3], 0
    %12 = vsyncpa [#allocation6], 0
    %13 = vsyncpa [#allocation4], 0
    // Predicated region
    $region2: #{tpu_custom_call.1} parent=1 // pred_check
      _
    $region3: #{tpu_custom_call.1} parent=1 // pred_check_branch
      %15 = sbr.rel (0) target = $region5
    $region4: #{tpu_custom_call.1} parent=1 // pred_region
      _
    $region5: #{tpu_custom_call.1} parent=1 // pred_fallthru
      _
    // Predicated region
    $region6: #{tpu_custom_call.1} parent=1 // pred_check
      _
    $region7: #{tpu_custom_call.1} parent=1 // pred_check_branch
      %17 = sbr.rel (0) target = $region9
    $region8: #{tpu_custom_call.1} parent=1 // pred_region
      _
    $region9: #{tpu_custom_call.1} parent=1 // pred_fallthru
      _
    // Predicated region
    $region10: #{tpu_custom_call.1} parent=1 // pred_check
      _
    $region11: #{tpu_custom_call.1} parent=1 // pred_check_branch
      %19 = sbr.rel (0) target = $region13
    $region12: #{tpu_custom_call.1} parent=1 // pred_region
      _
    $region13: #{tpu_custom_call.1} parent=1 // pred_fallthru
      _
    // Predicated region
    $region14: #{tpu_custom_call.1} parent=1 // pred_check
      _
    $region15: #{tpu_custom_call.1} parent=1 // pred_check_branch
      %21 = sbr.rel (0) target = $region17
    $region16: #{tpu_custom_call.1} parent=1 // pred_region
      %23 = vsyncadd [#allocation3], 0
      %s24 = sshll.u32 %s3, 4
      %s25 = int_to_ptr.hbm [resolvable:$true] %s24
      %s26 = sshll.u32 [#allocation2], 4
      %s27 = int_to_ptr.vmem [resolvable:$true] %s26
      %32 = dma.hbm_to_vmem [thread:$0]  %s25, 2048, %s27, [#allocation3], 128, 128, 8
    $region17: #{tpu_custom_call.1} parent=1 // pred_fallthru
      _
    // Predicated region
    $region18: #{tpu_custom_call.1} parent=1 // pred_check
      _
    $region19: #{tpu_custom_call.1} parent=1 // pred_check_branch
      %34 = sbr.rel (0) target = $region21
    $region20: #{tpu_custom_call.1} parent=1 // pred_region
      %36 = vsyncadd [#allocation6], 0
      %s37 = sshll.u32 %s4, 4
      %s38 = int_to_ptr.hbm [resolvable:$true] %s37
      %s39 = sshll.u32 [#allocation5], 4
      %s40 = int_to_ptr.vmem [resolvable:$true] %s39
      %45 = dma.hbm_to_vmem [thread:$0]  %s38, 2048, %s40, [#allocation6], 64, 64, 4
    $region21: #{tpu_custom_call.1} parent=1 // pred_fallthru
      _
    // Predicated region
    $region22: #{tpu_custom_call.1} parent=1 // pred_check
      _
    $region23: #{tpu_custom_call.1} parent=1 // pred_check_branch
      %47 = sbr.rel (0) target = $region25
    $region24: #{tpu_custom_call.1} parent=1 // pred_region
      _
    $region25: #{tpu_custom_call.1} parent=1 // pred_fallthru
      _
    // Predicated region
    $region26: #{tpu_custom_call.1} parent=1 // pred_check
      _
    $region27: #{tpu_custom_call.1} parent=1 // pred_check_branch
      %49 = sbr.rel (0) target = $region29
    $region28: #{tpu_custom_call.1} parent=1 // pred_region
      %51 = dma.done [#allocation3], 2048
    $region29: #{tpu_custom_call.1} parent=1 // pred_fallthru
      _
    // Predicated region
    $region30: #{tpu_custom_call.1} parent=1 // pred_check
      _
    $region31: #{tpu_custom_call.1} parent=1 // pred_check_branch
      %53 = sbr.rel (0) target = $region33
    $region32: #{tpu_custom_call.1} parent=1 // pred_region
      %55 = dma.done [#allocation6], 2048
    $region33: #{tpu_custom_call.1} parent=1 // pred_fallthru
      _
    %v56 = vld [vmem:[%s2] sm:$0xff]
    %v57 = vld [vmem:[%s2 + $0x8] sm:$0x3]
    %v58 = vld [vmem:[%s2 + $0x10] sm:$0xff]
    %v59 = vld [vmem:[%s2 + $0x18] sm:$0x3]
    %v60 = vld [vmem:[#allocation2] sm:$0xff]
    %v61 = vld [vmem:[#allocation2 + $0x8] sm:$0xff]
    %v62 = vld [vmem:[#allocation2 + $0x10] sm:$0xff]
    %v63 = vld [vmem:[#allocation2 + $0x18] sm:$0xff]
    %v64 = vld [vmem:[#allocation2 + $0x20] sm:$0xff]
    %v65 = vld [vmem:[#allocation2 + $0x28] sm:$0xff]
    %v66 = vld [vmem:[#allocation2 + $0x30] sm:$0xff]
    %v67 = vld [vmem:[#allocation2 + $0x38] sm:$0xff]
    %v68 = vld [vmem:[#allocation2 + $0x40] sm:$0xff]
    %v69 = vld [vmem:[#allocation2 + $0x48] sm:$0xff]
    %v70 = vld [vmem:[#allocation2 + $0x50] sm:$0xff]
    %v71 = vld [vmem:[#allocation2 + $0x58] sm:$0xff]
    %v72 = vld [vmem:[#allocation2 + $0x60] sm:$0xff]
    %v73 = vld [vmem:[#allocation2 + $0x68] sm:$0xff]
    %v74 = vld [vmem:[#allocation2 + $0x70] sm:$0xff]
    %v75 = vld [vmem:[#allocation2 + $0x78] sm:$0xff]
    %v76 = vld [vmem:[#allocation5] sm:$0xf]
    %v77 = vld [vmem:[#allocation5 + $0x4] sm:$0xf]
    %v78 = vld [vmem:[#allocation5 + $0x8] sm:$0xf]
    %v79 = vld [vmem:[#allocation5 + $0xc] sm:$0xf]
    %v80 = vld [vmem:[#allocation5 + $0x10] sm:$0xf]
    %v81 = vld [vmem:[#allocation5 + $0x14] sm:$0xf]
    %v82 = vld [vmem:[#allocation5 + $0x18] sm:$0xf]
    %v83 = vld [vmem:[#allocation5 + $0x1c] sm:$0xf]
    %v84 = vld [vmem:[#allocation5 + $0x20] sm:$0xf]
    %v85 = vld [vmem:[#allocation5 + $0x24] sm:$0xf]
    %v86 = vld [vmem:[#allocation5 + $0x28] sm:$0xf]
    %v87 = vld [vmem:[#allocation5 + $0x2c] sm:$0xf]
    %v88 = vld [vmem:[#allocation5 + $0x30] sm:$0xf]
    %v89 = vld [vmem:[#allocation5 + $0x34] sm:$0xf]
    %v90 = vld [vmem:[#allocation5 + $0x38] sm:$0xf]
    %v91 = vld [vmem:[#allocation5 + $0x3c] sm:$0xf]
    %v92 = vld [vmem:[#allocation5 + $0x40] sm:$0xf]
    %v93 = vld [vmem:[#allocation5 + $0x44] sm:$0xf]
    %v94 = vld [vmem:[#allocation5 + $0x48] sm:$0xf]
    %v95 = vld [vmem:[#allocation5 + $0x4c] sm:$0xf]
    %v96 = vld [vmem:[#allocation5 + $0x50] sm:$0xf]
    %v97 = vld [vmem:[#allocation5 + $0x54] sm:$0xf]
    %v98 = vld [vmem:[#allocation5 + $0x58] sm:$0xf]
    %v99 = vld [vmem:[#allocation5 + $0x5c] sm:$0xf]
    %v100 = vld [vmem:[#allocation5 + $0x60] sm:$0xf]
    %v101 = vld [vmem:[#allocation5 + $0x64] sm:$0xf]
    %v102 = vld [vmem:[#allocation5 + $0x68] sm:$0xf]
    %v103 = vld [vmem:[#allocation5 + $0x6c] sm:$0xf]
    %v104 = vld [vmem:[#allocation5 + $0x70] sm:$0xf]
    %v105 = vld [vmem:[#allocation5 + $0x74] sm:$0xf]
    %v106 = vld [vmem:[#allocation5 + $0x78] sm:$0xf]
    %v107 = vld [vmem:[#allocation5 + $0x7c] sm:$0xf]
    %v108 = vld [vmem:[%s5] ss:$2 sm:$0x3]
    %v109 = vld [vmem:[%s5 + $0x1] sm:$0x1]
    loop: start=0, step=1, limit=2
    $region34: #{tpu_custom_call.1} parent=1 // loop_pre_header
      _
    $region35: #{tpu_custom_call.1} parent=1 // loop_header
      %s111 = sphi 0, %s115
      %p112 = scmp.ge.s32.totalorder %s111, 2
    $region36: #{tpu_custom_call.1} parent=1 // loop_header_branch
      %114 = sbr.rel (%p112) target = $region40
    $region37: #{tpu_custom_call.1} parent=1 // loop_body
      %s116 = smul.u32 %s111, 16
      %s117 = scalar_lea.vmem %s0, %s116
      %v118 = vld [vmem:[%s117] sm:$0xff]
      %v119 = vld [vmem:[%s117 + $0x8] sm:$0xff]
      %s120 = smul.u32 %s111, 4
      %s121 = scalar_lea.vmem %s1, %s120
      %v122 = vld [vmem:[%s121] sm:$0xf]
      %123 = vrot.lane.b32.xlu0 %v118, 8
      %v124 = vpop.permute.xlu0 %123
      %v125 = vadd.f32 %v118, %v124
      %126 = vrot.lane.b32.xlu0 %v125, 16
      %v127 = vpop.permute.xlu0 %126
      %v128 = vadd.f32 %v125, %v127
      %129 = vrot.lane.b32.xlu0 %v128, 32
      %v130 = vpop.permute.xlu0 %129
      %v131 = vadd.f32 %v128, %v130
      %132 = vrot.lane.b32.xlu0 %v131, 64
      %v133 = vpop.permute.xlu0 %132
      %v134 = vadd.f32 %v131, %v133
      %v135 = vmul.f32 %v134, 0.0625
      %v136 = vperm.slane %v135, 0
      %v137 = vsub.f32 %v118, %v136
      %v138 = vsub.f32 %v119, %v136
      %v139 = vadd.f32 %v137, %v138
      %v140 = vrot.slane %v139, 4
      %v141 = vadd.f32 %v139, %v140
      %v142 = vrot.slane %v141, 2
      %v143 = vadd.f32 %v141, %v142
      %v144 = vrot.slane %v143, 1
      %v145 = vadd.f32 %v143, %v144
      %v146 = vmul.f32 %v137, %v137
      %v147 = vmul.f32 %v138, %v138
      %v148 = vadd.f32 %v146, %v147
      %v149 = vrot.slane %v148, 4
      %v150 = vadd.f32 %v148, %v149
      %v151 = vrot.slane %v150, 2
      %v152 = vadd.f32 %v150, %v151
      %v153 = vrot.slane %v152, 1
      %v154 = vadd.f32 %v152, %v153
      %vm155 = vcmask 1040384
      %v156 = vsel %vm155, %v145, %v154
      %157 = vrot.lane.b32.xlu0 %v156, 8
      %v158 = vpop.permute.xlu0 %157
      %v159 = vadd.f32 %v156, %v158
      %160 = vrot.lane.b32.xlu0 %v159, 16
      %v161 = vpop.permute.xlu0 %160
      %v162 = vadd.f32 %v159, %v161
      %163 = vrot.lane.b32.xlu0 %v162, 32
      %v164 = vpop.permute.xlu0 %163
      %v165 = vadd.f32 %v162, %v164
      %166 = vrot.lane.b32.xlu0 %v165, 64
      %v167 = vpop.permute.xlu0 %166
      %v168 = vadd.f32 %v165, %v167
      %v169 = vmul.f32 %v168, 0.00390625
      %v170 = vmul.f32 %v169, %v169
      %v172 = vrot.slane %v170, 7
      %v174 = vsub.f32 %v169, %v172
      %v175 = vmax.f32 %v174, 0.0
      %v176 = vadd.f32 %v175, 1e-05
      %v177 = vrsqrt.pop %v176
      %v178 = vmul.f32 %v177, %v176
      %v179 = vmul.f32 %v178, %v177
      %v180 = vmul.f32 0.5, %v179
      %v181 = vsub.f32 1.5, %v180
      %v182 = vmul.f32 %v177, %v181
      %vm183 = vweird.f32 %v176
      %vm184 = vweird.f32 %v177
      %vm185 = vmor %vm183, %vm184
      %v186 = vsel %vm185, %v177, %v182
      %v188 = vrot.slane %v186, 1
      %v190 = vmul.f32 %v122, %v188
      %v191 = vadd.f32 %v135, %v169
      %v192 = vmul.f32 %v191, %v190
      %v194 = vrot.slane %v192, 7
      %v196 = vsub.f32 %v122, %v194
      %v197 = vperm.slane %v190, 0
      %v198 = vmul.f32 %v118, %v197
      %v199 = vmul.f32 %v119, %v197
      %v200 = vperm.slane %v196, 1
      %v201 = vadd.f32 %v198, %v200
      %v202 = vadd.f32 %v199, %v200
      %v203 = vrot.slane %v201, 7
      %v204 = vrot.slane %v202, 7
      %v205 = vlaneseq
      %v206 = vshrl.u32 %v205, 7
      %vm207 = vcmp.lt.s32.totalorder %v206, 1
      %v208 = vsel %vm207, %v203, %v204
      %v209 = vsel %vm207, %v204, %v203
      %210 = vrot.lane.b32.xlu0 %v209, 8
      %v211 = vpop.permute.xlu0 %210
      %212 = vrot.lane.b32.xlu0 %v208, 8
      %v213 = vpop.permute.xlu0 %212
      %v214 = vperm.slane %v56, 0
      %v215 = vmul.f32 %v211, %v214
      %v216 = vmul.f32 %v213, %v214
      %v217 = vperm.slane %v56, 1
      %v218 = vmul.f32 %v209, %v217
      %v219 = vmul.f32 %v208, %v217
      %v220 = vadd.f32 %v215, %v218
      %v221 = vadd.f32 %v216, %v219
      %222 = vrot.lane.b32.xlu0 %v209, 120
      %v223 = vpop.permute.xlu0 %222
      %224 = vrot.lane.b32.xlu0 %v208, 120
      %v225 = vpop.permute.xlu0 %224
      %v226 = vperm.slane %v56, 2
      %v227 = vmul.f32 %v223, %v226
      %v228 = vmul.f32 %v225, %v226
      %v229 = vadd.f32 %v220, %v227
      %v230 = vadd.f32 %v221, %v228
      %231 = vrot.lane.b32.xlu0 %v201, 8
      %v232 = vpop.permute.xlu0 %231
      %233 = vrot.lane.b32.xlu0 %v202, 8
      %v234 = vpop.permute.xlu0 %233
      %v235 = vperm.slane %v56, 3
      %v236 = vmul.f32 %v232, %v235
      %v237 = vmul.f32 %v234, %v235
      %v238 = vadd.f32 %v229, %v236
      %v239 = vadd.f32 %v230, %v237
      %v240 = vperm.slane %v56, 4
      %v241 = vmul.f32 %v201, %v240
      %v242 = vmul.f32 %v202, %v240
      %v243 = vadd.f32 %v238, %v241
      %v244 = vadd.f32 %v239, %v242
      %245 = vrot.lane.b32.xlu0 %v201, 120
      %v246 = vpop.permute.xlu0 %245
      %247 = vrot.lane.b32.xlu0 %v202, 120
      %v248 = vpop.permute.xlu0 %247
      %v249 = vperm.slane %v56, 5
      %v250 = vmul.f32 %v246, %v249
      %v251 = vmul.f32 %v248, %v249
      %v252 = vadd.f32 %v243, %v250
      %v253 = vadd.f32 %v244, %v251
      %v254 = vrot.slane %v201, 1
      %v255 = vrot.slane %v202, 1
      %vm256 = vcmp.lt.s32.totalorder %v206, 7
      %v257 = vsel %vm256, %v254, %v255
      %v258 = vsel %vm256, %v255, %v254
      %259 = vrot.lane.b32.xlu0 %v257, 8
      %v260 = vpop.permute.xlu0 %259
      %261 = vrot.lane.b32.xlu0 %v258, 8
      %v262 = vpop.permute.xlu0 %261
      %v263 = vperm.slane %v56, 6
      %v264 = vmul.f32 %v260, %v263
      %v265 = vmul.f32 %v262, %v263
      %v266 = vadd.f32 %v252, %v264
      %v267 = vadd.f32 %v253, %v265
      %v268 = vperm.slane %v56, 7
      %v269 = vmul.f32 %v257, %v268
      %v270 = vmul.f32 %v258, %v268
      %v271 = vadd.f32 %v266, %v269
      %v272 = vadd.f32 %v267, %v270
      %273 = vrot.lane.b32.xlu0 %v257, 120
      %v274 = vpop.permute.xlu0 %273
      %275 = vrot.lane.b32.xlu0 %v258, 120
      %v276 = vpop.permute.xlu0 %275
      %v277 = vperm.slane %v57, 0
      %v278 = vmul.f32 %v274, %v277
      %v279 = vmul.f32 %v276, %v277
      %v280 = vadd.f32 %v271, %v278
      %v281 = vadd.f32 %v272, %v279
      %v282 = vperm.slane %v57, 1
      %v283 = vadd.f32 %v280, %v282
      %v284 = vadd.f32 %v281, %v282
      %v285 = vrot.slane %v283, 7
      %v286 = vrot.slane %v284, 7
      %v287 = vsel %vm207, %v285, %v286
      %v288 = vsel %vm207, %v286, %v285
      %289 = vrot.lane.b32.xlu0 %v288, 8
      %v290 = vpop.permute.xlu0 %289
      %291 = vrot.lane.b32.xlu0 %v287, 8
      %v292 = vpop.permute.xlu0 %291
      %v293 = vperm.slane %v58, 0
      %v294 = vmul.f32 %v290, %v293
      %v295 = vmul.f32 %v292, %v293
      %v296 = vperm.slane %v58, 1
      %v297 = vmul.f32 %v288, %v296
      %v298 = vmul.f32 %v287, %v296
      %v299 = vadd.f32 %v294, %v297
      %v300 = vadd.f32 %v295, %v298
      %301 = vrot.lane.b32.xlu0 %v288, 120
      %v302 = vpop.permute.xlu0 %301
      %303 = vrot.lane.b32.xlu0 %v287, 120
      %v304 = vpop.permute.xlu0 %303
      %v305 = vperm.slane %v58, 2
      %v306 = vmul.f32 %v302, %v305
      %v307 = vmul.f32 %v304, %v305
      %v308 = vadd.f32 %v299, %v306
      %v309 = vadd.f32 %v300, %v307
      %310 = vrot.lane.b32.xlu0 %v283, 8
      %v311 = vpop.permute.xlu0 %310
      %312 = vrot.lane.b32.xlu0 %v284, 8
      %v313 = vpop.permute.xlu0 %312
      %v314 = vperm.slane %v58, 3
      %v315 = vmul.f32 %v311, %v314
      %v316 = vmul.f32 %v313, %v314
      %v317 = vadd.f32 %v308, %v315
      %v318 = vadd.f32 %v309, %v316
      %v319 = vperm.slane %v58, 4
      %v320 = vmul.f32 %v283, %v319
      %v321 = vmul.f32 %v284, %v319
      %v322 = vadd.f32 %v317, %v320
      %v323 = vadd.f32 %v318, %v321
      %324 = vrot.lane.b32.xlu0 %v283, 120
      %v325 = vpop.permute.xlu0 %324
      %326 = vrot.lane.b32.xlu0 %v284, 120
      %v327 = vpop.permute.xlu0 %326
      %v328 = vperm.slane %v58, 5
      %v329 = vmul.f32 %v325, %v328
      %v330 = vmul.f32 %v327, %v328
      %v331 = vadd.f32 %v322, %v329
      %v332 = vadd.f32 %v323, %v330
      %v333 = vrot.slane %v283, 1
      %v334 = vrot.slane %v284, 1
      %v335 = vsel %vm256, %v333, %v334
      %v336 = vsel %vm256, %v334, %v333
      %337 = vrot.lane.b32.xlu0 %v335, 8
      %v338 = vpop.permute.xlu0 %337
      %339 = vrot.lane.b32.xlu0 %v336, 8
      %v340 = vpop.permute.xlu0 %339
      %v341 = vperm.slane %v58, 6
      %v342 = vmul.f32 %v338, %v341
      %v343 = vmul.f32 %v340, %v341
      %v344 = vadd.f32 %v331, %v342
      %v345 = vadd.f32 %v332, %v343
      %v346 = vperm.slane %v58, 7
      %v347 = vmul.f32 %v335, %v346
      %v348 = vmul.f32 %v336, %v346
      %v349 = vadd.f32 %v344, %v347
      %v350 = vadd.f32 %v345, %v348
      %351 = vrot.lane.b32.xlu0 %v335, 120
      %v352 = vpop.permute.xlu0 %351
      %353 = vrot.lane.b32.xlu0 %v336, 120
      %v354 = vpop.permute.xlu0 %353
      %v355 = vperm.slane %v59, 0
      %v356 = vmul.f32 %v352, %v355
      %v357 = vmul.f32 %v354, %v355
      %v358 = vadd.f32 %v349, %v356
      %v359 = vadd.f32 %v350, %v357
      %v360 = vperm.slane %v59, 1
      %v361 = vadd.f32 %v358, %v360
      %v362 = vadd.f32 %v359, %v360
      %v363 = vadd.f32 %v118, %v361
      %v364 = vadd.f32 %v119, %v362
      %s365 = scalar_lea.vmem [#allocation7], %s116
      %366 = vst [vmem:[%s365] sm:$0xff] %v363
      %367 = vst [vmem:[%s365 + $0x8] sm:$0xff] %v364
      %368 = vrot.lane.b32.xlu0 %v363, 8
      %v369 = vpop.permute.xlu0 %368
      %v370 = vadd.f32 %v363, %v369
      %371 = vrot.lane.b32.xlu0 %v370, 16
      %v372 = vpop.permute.xlu0 %371
      %v373 = vadd.f32 %v370, %v372
      %374 = vrot.lane.b32.xlu0 %v373, 32
      %v375 = vpop.permute.xlu0 %374
      %v376 = vadd.f32 %v373, %v375
      %377 = vrot.lane.b32.xlu0 %v376, 64
      %v378 = vpop.permute.xlu0 %377
      %v379 = vadd.f32 %v376, %v378
      %v380 = vmul.f32 %v379, 0.0625
      %v381 = vperm.slane %v380, 0
      %v382 = vsub.f32 %v363, %v381
      %v383 = vsub.f32 %v364, %v381
      %v384 = vadd.f32 %v382, %v383
      %v385 = vrot.slane %v384, 4
      %v386 = vadd.f32 %v384, %v385
      %v387 = vrot.slane %v386, 2
      %v388 = vadd.f32 %v386, %v387
      %v389 = vrot.slane %v388, 1
      %v390 = vadd.f32 %v388, %v389
      %v391 = vmul.f32 %v382, %v382
      %v392 = vmul.f32 %v383, %v383
      %v393 = vadd.f32 %v391, %v392
      %v394 = vrot.slane %v393, 4
      %v395 = vadd.f32 %v393, %v394
      %v396 = vrot.slane %v395, 2
      %v397 = vadd.f32 %v395, %v396
      %v398 = vrot.slane %v397, 1
      %v399 = vadd.f32 %v397, %v398
      %v400 = vsel %vm155, %v390, %v399
      %401 = vrot.lane.b32.xlu0 %v400, 8
      %v402 = vpop.permute.xlu0 %401
      %v403 = vadd.f32 %v400, %v402
      %404 = vrot.lane.b32.xlu0 %v403, 16
      %v405 = vpop.permute.xlu0 %404
      %v406 = vadd.f32 %v403, %v405
      %407 = vrot.lane.b32.xlu0 %v406, 32
      %v408 = vpop.permute.xlu0 %407
      %v409 = vadd.f32 %v406, %v408
      %410 = vrot.lane.b32.xlu0 %v409, 64
      %v411 = vpop.permute.xlu0 %410
      %v412 = vadd.f32 %v409, %v411
      %v413 = vmul.f32 %v412, 0.00390625
      %v414 = vmul.f32 %v413, %v413
      %v416 = vrot.slane %v414, 7
      %v418 = vsub.f32 %v413, %v416
      %v419 = vmax.f32 %v418, 0.0
      %v420 = vadd.f32 %v419, 1e-05
      %v421 = vrsqrt.pop %v420
      %v422 = vmul.f32 %v421, %v420
      %v423 = vmul.f32 %v422, %v421
      %v424 = vmul.f32 0.5, %v423
      %v425 = vsub.f32 1.5, %v424
      %v426 = vmul.f32 %v421, %v425
      %vm427 = vweird.f32 %v420
      %vm428 = vweird.f32 %v421
      %vm429 = vmor %vm427, %vm428
      %v430 = vsel %vm429, %v421, %v426
      %v432 = vrot.slane %v430, 7
      %v434 = vmul.f32 %v122, %v432
      %v435 = vadd.f32 %v380, %v413
      %v437 = vrot.slane %v434, 2
      %v439 = vmul.f32 %v435, %v437
      %v441 = vrot.slane %v439, 5
      %v443 = vsub.f32 %v122, %v441
      %s444 = sadd.s32 0, %s116
      %s445 = scalar_lea.vmem [#allocation7], %s444
      %v446 = vld [vmem:[%s445] sm:$0xff]
      %v447 = vld [vmem:[%s445 + $0x8] sm:$0xff]
      %v448 = vperm.slane %v434, 2
      %v449 = vmul.f32 %v446, %v448
      %v450 = vmul.f32 %v447, %v448
      %v451 = vperm.slane %v443, 3
      %v452 = vadd.f32 %v449, %v451
      %v453 = vadd.f32 %v450, %v451
      %v454 = vpack.c.bf16 %v453, %v452
      %v456 = vperm.slane %v108, 0
      %v457 = vperm.slane %v108, 1
      %v476 = vunpack.c.l.b16 %v60
      %v477 = vunpack.c.h.b16 %v60
      %v478 = vunpack.c.l.b16 %v61
      %v479 = vunpack.c.h.b16 %v61
      %v480 = vunpack.c.l.b16 %v62
      %v481 = vunpack.c.h.b16 %v62
      %v482 = vunpack.c.l.b16 %v63
      %v483 = vunpack.c.h.b16 %v63
      %v484 = vunpack.c.l.b16 %v64
      %v485 = vunpack.c.h.b16 %v64
      %v486 = vunpack.c.l.b16 %v65
      %v487 = vunpack.c.h.b16 %v65
      %v488 = vunpack.c.l.b16 %v66
      %v489 = vunpack.c.h.b16 %v66
      %v490 = vunpack.c.l.b16 %v67
      %v491 = vunpack.c.h.b16 %v67
      %v492 = vunpack.c.l.b16 %v68
      %v493 = vunpack.c.h.b16 %v68
      %v494 = vunpack.c.l.b16 %v69
      %v495 = vunpack.c.h.b16 %v69
      %v496 = vunpack.c.l.b16 %v70
      %v497 = vunpack.c.h.b16 %v70
      %v498 = vunpack.c.l.b16 %v71
      %v499 = vunpack.c.h.b16 %v71
      %v500 = vunpack.c.l.b16 %v72
      %v501 = vunpack.c.h.b16 %v72
      %v502 = vunpack.c.l.b16 %v73
      %v503 = vunpack.c.h.b16 %v73
      %v504 = vunpack.c.l.b16 %v74
      %v505 = vunpack.c.h.b16 %v74
      %v506 = vunpack.c.l.b16 %v75
      %v507 = vunpack.c.h.b16 %v75
      %v508 = vpack.c.b16 %v478, %v476
      %v509 = vpack.c.b16 %v479, %v477
      %v510 = vpack.c.b16 %v482, %v480
      %v511 = vpack.c.b16 %v483, %v481
      %v512 = vpack.c.b16 %v486, %v484
      %v513 = vpack.c.b16 %v487, %v485
      %v514 = vpack.c.b16 %v490, %v488
      %v515 = vpack.c.b16 %v491, %v489
      %v516 = vpack.c.b16 %v494, %v492
      %v517 = vpack.c.b16 %v495, %v493
      %v518 = vpack.c.b16 %v498, %v496
      %v519 = vpack.c.b16 %v499, %v497
      %v520 = vpack.c.b16 %v502, %v500
      %v521 = vpack.c.b16 %v503, %v501
      %v522 = vpack.c.b16 %v506, %v504
      %v523 = vpack.c.b16 %v507, %v505
      %540 = vmatpush.bf16.msra.mxu0 %v522
      %541 = vmatpush.bf16.msra.mxu0 %v520
      %542 = vmatpush.bf16.msra.mxu0 %v518
      %543 = vmatpush.bf16.msra.mxu0 %v516
      %544 = vmatpush.bf16.msra.mxu0 %v514
      %545 = vmatpush.bf16.msra.mxu0 %v512
      %546 = vmatpush.bf16.msra.mxu0 %v510
      %547 = vmatpush.bf16.msra.mxu0 %v508
      %548 = vmatmul.bf16.gmra.mxu0 %v454
      %v549 = vpop.f32.mrf.mxu0
      %v550 = vadd.f32 %v456, %v549
      %v551 = vpop.f32.mrf.mxu0
      %v552 = vadd.f32 %v456, %v551
      %553 = vdwg.mxu0
      %554 = vmatpush.bf16.msra.mxu0 %v523
      %555 = vmatpush.bf16.msra.mxu0 %v521
      %556 = vmatpush.bf16.msra.mxu0 %v519
      %557 = vmatpush.bf16.msra.mxu0 %v517
      %558 = vmatpush.bf16.msra.mxu0 %v515
      %559 = vmatpush.bf16.msra.mxu0 %v513
      %560 = vmatpush.bf16.msra.mxu0 %v511
      %561 = vmatpush.bf16.msra.mxu0 %v509
      %562 = vmatmul.bf16.gmra.mxu0 %v454
      %v563 = vpop.f32.mrf.mxu0
      %v564 = vadd.f32 %v457, %v563
      %v565 = vpop.f32.mrf.mxu0
      %v566 = vadd.f32 %v457, %v565
      %567 = vdwg.mxu0
      %v568 = vmul.f32 %v550, 0.5
      %v569 = vmul.f32 %v564, 0.5
      %v570 = vmul.f32 %v552, 0.5
      %v571 = vmul.f32 %v566, 0.5
      %v572 = vmul.f32 %v550, 0.044715
      %v573 = vmul.f32 %v564, 0.044715
      %v574 = vmul.f32 %v552, 0.044715
      %v575 = vmul.f32 %v566, 0.044715
      %v576 = vmul.f32 %v572, %v550
      %v577 = vmul.f32 %v573, %v564
      %v578 = vmul.f32 %v574, %v552
      %v579 = vmul.f32 %v575, %v566
      %v580 = vmul.f32 %v576, %v550
      %v581 = vmul.f32 %v577, %v564
      %v582 = vmul.f32 %v578, %v552
      %v583 = vmul.f32 %v579, %v566
      %v584 = vadd.f32 %v550, %v580
      %v585 = vadd.f32 %v564, %v581
      %v586 = vadd.f32 %v552, %v582
      %v587 = vadd.f32 %v566, %v583
      %v588 = vmul.f32 %v584, 0.7978846
      %v589 = vmul.f32 %v585, 0.7978846
      %v590 = vmul.f32 %v586, 0.7978846
      %v591 = vmul.f32 %v587, 0.7978846
      %v592 = vtanh.pop %v588
      %v593 = vtanh.pop %v589
      %v594 = vtanh.pop %v590
      %v595 = vtanh.pop %v591
      %v596 = vadd.f32 %v592, 1.0
      %v597 = vadd.f32 %v593, 1.0
      %v598 = vadd.f32 %v594, 1.0
      %v599 = vadd.f32 %v595, 1.0
      %v600 = vmul.f32 %v568, %v596
      %v601 = vmul.f32 %v569, %v597
      %v602 = vmul.f32 %v570, %v598
      %v603 = vmul.f32 %v571, %v599
      %v604 = vpack.c.bf16 %v602, %v600
      %v605 = vpack.c.bf16 %v603, %v601
      %v606 = vperm.slane %v109, 0
      %v639 = vunpack.c.l.b16 %v76
      %v640 = vunpack.c.l.b16 %v77
      %v641 = vunpack.c.l.b16 %v78
      %v642 = vunpack.c.l.b16 %v79
      %v643 = vunpack.c.l.b16 %v80
      %v644 = vunpack.c.l.b16 %v81
      %v645 = vunpack.c.l.b16 %v82
      %v646 = vunpack.c.l.b16 %v83
      %v647 = vunpack.c.l.b16 %v84
      %v648 = vunpack.c.l.b16 %v85
      %v649 = vunpack.c.l.b16 %v86
      %v650 = vunpack.c.l.b16 %v87
      %v651 = vunpack.c.l.b16 %v88
      %v652 = vunpack.c.l.b16 %v89
      %v653 = vunpack.c.l.b16 %v90
      %v654 = vunpack.c.l.b16 %v91
      %v655 = vunpack.c.l.b16 %v92
      %v656 = vunpack.c.l.b16 %v93
      %v657 = vunpack.c.l.b16 %v94
      %v658 = vunpack.c.l.b16 %v95
      %v659 = vunpack.c.l.b16 %v96
      %v660 = vunpack.c.l.b16 %v97
      %v661 = vunpack.c.l.b16 %v98
      %v662 = vunpack.c.l.b16 %v99
      %v663 = vunpack.c.l.b16 %v100
      %v664 = vunpack.c.l.b16 %v101
      %v665 = vunpack.c.l.b16 %v102
      %v666 = vunpack.c.l.b16 %v103
      %v667 = vunpack.c.l.b16 %v104
      %v668 = vunpack.c.l.b16 %v105
      %v669 = vunpack.c.l.b16 %v106
      %v670 = vunpack.c.l.b16 %v107
      %v671 = vpack.c.b16 %v640, %v639
      %v672 = vpack.c.b16 %v642, %v641
      %v673 = vpack.c.b16 %v644, %v643
      %v674 = vpack.c.b16 %v646, %v645
      %v675 = vpack.c.b16 %v648, %v647
      %v676 = vpack.c.b16 %v650, %v649
      %v677 = vpack.c.b16 %v652, %v651
      %v678 = vpack.c.b16 %v654, %v653
      %v679 = vpack.c.b16 %v656, %v655
      %v680 = vpack.c.b16 %v658, %v657
      %v681 = vpack.c.b16 %v660, %v659
      %v682 = vpack.c.b16 %v662, %v661
      %v683 = vpack.c.b16 %v664, %v663
      %v684 = vpack.c.b16 %v666, %v665
      %v685 = vpack.c.b16 %v668, %v667
      %v686 = vpack.c.b16 %v670, %v669
      %703 = vmatpush.bf16.msra.mxu0 %v678
      %704 = vmatpush.bf16.msra.mxu0 %v677
      %705 = vmatpush.bf16.msra.mxu0 %v676
      %706 = vmatpush.bf16.msra.mxu0 %v675
      %707 = vmatpush.bf16.msra.mxu0 %v674
      %708 = vmatpush.bf16.msra.mxu0 %v673
      %709 = vmatpush.bf16.msra.mxu0 %v672
      %710 = vmatpush.bf16.msra.mxu0 %v671
      %711 = vmatmul.bf16.gmra.mxu0 %v604
      %v712 = vpop.f32.mrf.mxu0
      %v713 = vadd.f32 %v606, %v712
      %v714 = vpop.f32.mrf.mxu0
      %v715 = vadd.f32 %v606, %v714
      %716 = vdwg.mxu0
      %717 = vmatpush.bf16.msra.mxu0 %v686
      %718 = vmatpush.bf16.msra.mxu0 %v685
      %719 = vmatpush.bf16.msra.mxu0 %v684
      %720 = vmatpush.bf16.msra.mxu0 %v683
      %721 = vmatpush.bf16.msra.mxu0 %v682
      %722 = vmatpush.bf16.msra.mxu0 %v681
      %723 = vmatpush.bf16.msra.mxu0 %v680
      %724 = vmatpush.bf16.msra.mxu0 %v679
      %725 = vmatmul.bf16.gmra.mxu0 %v605
      %v726 = vpop.f32.mrf.mxu0
      %v727 = vadd.f32 %v713, %v726
      %v728 = vpop.f32.mrf.mxu0
      %v729 = vadd.f32 %v715, %v728
      %730 = vdwg.mxu0
      %v731 = vadd.f32 %v446, %v727
      %v732 = vadd.f32 %v447, %v729
      %733 = vst [vmem:[%s445] sm:$0xff] %v731
      %734 = vst [vmem:[%s445 + $0x8] sm:$0xff] %v732
    $region38: #{tpu_custom_call.1} parent=1 // loop_footer
      %s115 = sadd.s32 1, %s111
    $region39: #{tpu_custom_call.1} parent=1 // loop_footer_branch
      %110 = sbr.rel target = $region35
    $region40: #{tpu_custom_call.1} parent=1 // loop_exit
      _
    // Predicated region
    $region41: #{tpu_custom_call.1} parent=1 // pred_check
      _
    $region42: #{tpu_custom_call.1} parent=1 // pred_check_branch
      %736 = sbr.rel (0) target = $region44
    $region43: #{tpu_custom_call.1} parent=1 // pred_region
      %738 = vsyncadd [#allocation4], 0
      %s739 = sshll.u32 [#allocation7], 4
      %s740 = int_to_ptr.vmem [resolvable:$true] %s739
      %s741 = sshll.u32 %s6, 4
      %s742 = int_to_ptr.hbm [resolvable:$true] %s741
      %747 = dma.vmem_to_hbm [thread:$0]  %s740, 512, %s742, [#allocation4], 128, 128, 8
    $region44: #{tpu_custom_call.1} parent=1 // pred_fallthru
      _
    // Predicated region
    $region45: #{tpu_custom_call.1} parent=1 // pred_check
      _
    $region46: #{tpu_custom_call.1} parent=1 // pred_check_branch
      %749 = sbr.rel (0) target = $region48
    $region47: #{tpu_custom_call.1} parent=1 // pred_region
      %751 = dma.done [#allocation4], 512
    $region48: #{tpu_custom_call.1} parent=1 // pred_fallthru
      _
    %752 = vsyncpa [#allocation3], 1
    %753 = vsyncpa [#allocation6], 1
    %754 = vsyncpa [#allocation4], 1

// kernel: tpu_custom_call.1
$region0: #{tpu_custom_call.1}
  #allocation0 [shape = 'u32[]', space=smem, size = 0x4, offset = 0x4, fixed_abs, tag = 'smem constant byte address 0x4 - core index']
  #allocation1 [shape = 'u32[72,128]{1,0:T(1,128)}', space=vmem, size = 0x9000, scoped, tag = 'internal scratch']
  %s0 = inlined_call_operand.vmem [shape: f32[2,16,128], index: 0, kind: input, shape index: {}]
  %s1 = inlined_call_operand.vmem [shape: f32[2,4,128], index: 1, kind: input, shape index: {}]
  %s2 = inlined_call_operand.vmem [shape: f32[2,10,128], index: 2, kind: input, shape index: {}]
  %s3 = inlined_call_operand.hbm [shape: bf16[128,256], index: 3, kind: input, shape index: {}]
  %s4 = inlined_call_operand.hbm [shape: bf16[256,128], index: 4, kind: input, shape index: {}]
  %s5 = inlined_call_operand.vmem [shape: f32[2,256], index: 5, kind: input, shape index: {}]
  %s6 = inlined_call_operand.hbm [shape: f32[2,16,128], index: 6, kind: output, shape index: {}]
  %s7 = sld [smem:[#allocation0]]
  $region49: #{tpu_custom_call.1} parent=0
    _
  %s9 = ssub.s32 1, %s7
  %s10 = scalar_select 0, %s9, %s7
  $region1: #{tpu_custom_call.1} parent=0
    #allocation2 [shape = 'u8[65536]{0}', space=vmem, size = 0x10000, scoped, tag = 'input window, operand 3, single buffered']
    #allocation3 [shape = 's32[1]{0}', space=sflag, size = 0x4, scoped, tag = 'scoped memory for tpu_custom_call.1']
    #allocation4 [shape = 's32[1]{0}', space=sflag, size = 0x4, scoped, tag = 'scoped memory for tpu_custom_call.1']
    #allocation5 [shape = 'u8[65536]{0}', space=vmem, size = 0x10000, scoped, tag = 'input window, operand 4, single buffered']
    #allocation6 [shape = 's32[1]{0}', space=sflag, size = 0x4, scoped, tag = 'scoped memory for tpu_custom_call.1']
    #allocation7 [shape = 'u8[16384]{0}', space=vmem, size = 0x4000, scoped, tag = 'output window, operand 0, single buffered']
    %11 = vsyncpa [#allocation3], 0
    %12 = vsyncpa [#allocation6], 0
    %13 = vsyncpa [#allocation4], 0
    // Predicated region
    $region2: #{tpu_custom_call.1} parent=1 // pred_check
      _
    $region3: #{tpu_custom_call.1} parent=1 // pred_check_branch
      %15 = sbr.rel (0) target = $region5
    $region4: #{tpu_custom_call.1} parent=1 // pred_region
      _
    $region5: #{tpu_custom_call.1} parent=1 // pred_fallthru
      _
    // Predicated region
    $region6: #{tpu_custom_call.1} parent=1 // pred_check
      _
    $region7: #{tpu_custom_call.1} parent=1 // pred_check_branch
      %17 = sbr.rel (0) target = $region9
    $region8: #{tpu_custom_call.1} parent=1 // pred_region
      _
    $region9: #{tpu_custom_call.1} parent=1 // pred_fallthru
      _
    // Predicated region
    $region10: #{tpu_custom_call.1} parent=1 // pred_check
      _
    $region11: #{tpu_custom_call.1} parent=1 // pred_check_branch
      %19 = sbr.rel (0) target = $region13
    $region12: #{tpu_custom_call.1} parent=1 // pred_region
      _
    $region13: #{tpu_custom_call.1} parent=1 // pred_fallthru
      _
    // Predicated region
    $region14: #{tpu_custom_call.1} parent=1 // pred_check
      _
    $region15: #{tpu_custom_call.1} parent=1 // pred_check_branch
      %21 = sbr.rel (0) target = $region17
    $region16: #{tpu_custom_call.1} parent=1 // pred_region
      %23 = vsyncadd [#allocation3], 0
      %s24 = sshll.u32 %s3, 4
      %s25 = int_to_ptr.hbm [resolvable:$true] %s24
      %s26 = sshll.u32 [#allocation2], 4
      %s27 = int_to_ptr.vmem [resolvable:$true] %s26
      %32 = dma.hbm_to_vmem [thread:$0]  %s25, 2048, %s27, [#allocation3], 128, 128, 8
    $region17: #{tpu_custom_call.1} parent=1 // pred_fallthru
      _
    // Predicated region
    $region18: #{tpu_custom_call.1} parent=1 // pred_check
      _
    $region19: #{tpu_custom_call.1} parent=1 // pred_check_branch
      %34 = sbr.rel (0) target = $region21
    $region20: #{tpu_custom_call.1} parent=1 // pred_region
      %36 = vsyncadd [#allocation6], 0
      %s37 = sshll.u32 %s4, 4
      %s38 = int_to_ptr.hbm [resolvable:$true] %s37
      %s39 = sshll.u32 [#allocation5], 4
      %s40 = int_to_ptr.vmem [resolvable:$true] %s39
      %45 = dma.hbm_to_vmem [thread:$0]  %s38, 2048, %s40, [#allocation6], 64, 64, 4
    $region21: #{tpu_custom_call.1} parent=1 // pred_fallthru
      _
    // Predicated region
    $region22: #{tpu_custom_call.1} parent=1 // pred_check
      _
    $region23: #{tpu_custom_call.1} parent=1 // pred_check_branch
      %47 = sbr.rel (0) target = $region25
    $region24: #{tpu_custom_call.1} parent=1 // pred_region
      _
    $region25: #{tpu_custom_call.1} parent=1 // pred_fallthru
      _
    // Predicated region
    $region26: #{tpu_custom_call.1} parent=1 // pred_check
      _
    $region27: #{tpu_custom_call.1} parent=1 // pred_check_branch
      %49 = sbr.rel (0) target = $region29
    $region28: #{tpu_custom_call.1} parent=1 // pred_region
      %51 = dma.done [#allocation3], 2048
    $region29: #{tpu_custom_call.1} parent=1 // pred_fallthru
      _
    // Predicated region
    $region30: #{tpu_custom_call.1} parent=1 // pred_check
      _
    $region31: #{tpu_custom_call.1} parent=1 // pred_check_branch
      %53 = sbr.rel (0) target = $region33
    $region32: #{tpu_custom_call.1} parent=1 // pred_region
      %55 = dma.done [#allocation6], 2048
    $region33: #{tpu_custom_call.1} parent=1 // pred_fallthru
      _
    %v56 = vld [vmem:[%s2] sm:$0xff]
    %v57 = vld [vmem:[%s2 + $0x8] sm:$0x3]
    %v58 = vld [vmem:[%s2 + $0x10] sm:$0xff]
    %v59 = vld [vmem:[%s2 + $0x18] sm:$0x3]
    %v60 = vld [vmem:[#allocation2] sm:$0xff]
    %v61 = vld [vmem:[#allocation2 + $0x8] sm:$0xff]
    %v62 = vld [vmem:[#allocation2 + $0x10] sm:$0xff]
    %v63 = vld [vmem:[#allocation2 + $0x18] sm:$0xff]
    %v64 = vld [vmem:[#allocation2 + $0x20] sm:$0xff]
    %v65 = vld [vmem:[#allocation2 + $0x28] sm:$0xff]
    %v66 = vld [vmem:[#allocation2 + $0x30] sm:$0xff]
    %v67 = vld [vmem:[#allocation2 + $0x38] sm:$0xff]
    %v68 = vld [vmem:[#allocation2 + $0x40] sm:$0xff]
    %v69 = vld [vmem:[#allocation2 + $0x48] sm:$0xff]
    %v70 = vld [vmem:[#allocation2 + $0x50] sm:$0xff]
    %v71 = vld [vmem:[#allocation2 + $0x58] sm:$0xff]
    %v72 = vld [vmem:[#allocation2 + $0x60] sm:$0xff]
    %v73 = vld [vmem:[#allocation2 + $0x68] sm:$0xff]
    %v74 = vld [vmem:[#allocation2 + $0x70] sm:$0xff]
    %v75 = vld [vmem:[#allocation2 + $0x78] sm:$0xff]
    %v76 = vld [vmem:[#allocation5] sm:$0xf]
    %v77 = vld [vmem:[#allocation5 + $0x4] sm:$0xf]
    %v78 = vld [vmem:[#allocation5 + $0x8] sm:$0xf]
    %v79 = vld [vmem:[#allocation5 + $0xc] sm:$0xf]
    %v80 = vld [vmem:[#allocation5 + $0x10] sm:$0xf]
    %v81 = vld [vmem:[#allocation5 + $0x14] sm:$0xf]
    %v82 = vld [vmem:[#allocation5 + $0x18] sm:$0xf]
    %v83 = vld [vmem:[#allocation5 + $0x1c] sm:$0xf]
    %v84 = vld [vmem:[#allocation5 + $0x20] sm:$0xf]
    %v85 = vld [vmem:[#allocation5 + $0x24] sm:$0xf]
    %v86 = vld [vmem:[#allocation5 + $0x28] sm:$0xf]
    %v87 = vld [vmem:[#allocation5 + $0x2c] sm:$0xf]
    %v88 = vld [vmem:[#allocation5 + $0x30] sm:$0xf]
    %v89 = vld [vmem:[#allocation5 + $0x34] sm:$0xf]
    %v90 = vld [vmem:[#allocation5 + $0x38] sm:$0xf]
    %v91 = vld [vmem:[#allocation5 + $0x3c] sm:$0xf]
    %v92 = vld [vmem:[#allocation5 + $0x40] sm:$0xf]
    %v93 = vld [vmem:[#allocation5 + $0x44] sm:$0xf]
    %v94 = vld [vmem:[#allocation5 + $0x48] sm:$0xf]
    %v95 = vld [vmem:[#allocation5 + $0x4c] sm:$0xf]
    %v96 = vld [vmem:[#allocation5 + $0x50] sm:$0xf]
    %v97 = vld [vmem:[#allocation5 + $0x54] sm:$0xf]
    %v98 = vld [vmem:[#allocation5 + $0x58] sm:$0xf]
    %v99 = vld [vmem:[#allocation5 + $0x5c] sm:$0xf]
    %v100 = vld [vmem:[#allocation5 + $0x60] sm:$0xf]
    %v101 = vld [vmem:[#allocation5 + $0x64] sm:$0xf]
    %v102 = vld [vmem:[#allocation5 + $0x68] sm:$0xf]
    %v103 = vld [vmem:[#allocation5 + $0x6c] sm:$0xf]
    %v104 = vld [vmem:[#allocation5 + $0x70] sm:$0xf]
    %v105 = vld [vmem:[#allocation5 + $0x74] sm:$0xf]
    %v106 = vld [vmem:[#allocation5 + $0x78] sm:$0xf]
    %v107 = vld [vmem:[#allocation5 + $0x7c] sm:$0xf]
    %v108 = vld [vmem:[%s5] ss:$2 sm:$0x3]
    %v109 = vld [vmem:[%s5 + $0x1] sm:$0x1]
    loop: start=0, step=1, limit=2
    $region34: #{tpu_custom_call.1} parent=1 // loop_pre_header
      _
    $region35: #{tpu_custom_call.1} parent=1 // loop_header
      %s111 = sphi 0, %s115
      %p112 = scmp.ge.s32.totalorder %s111, 2
    $region36: #{tpu_custom_call.1} parent=1 // loop_header_branch
      %114 = sbr.rel (%p112) target = $region40
    $region37: #{tpu_custom_call.1} parent=1 // loop_body
      %s116 = smul.u32 %s111, 16
      %s117 = scalar_lea.vmem %s0, %s116
      %v118 = vld [vmem:[%s117] sm:$0xff]
      %v119 = vld [vmem:[%s117 + $0x8] sm:$0xff]
      %s120 = smul.u32 %s111, 4
      %s121 = scalar_lea.vmem %s1, %s120
      %v122 = vld [vmem:[%s121] sm:$0xf]
      %123 = vrot.lane.b32.xlu0 %v118, 8
      %v124 = vpop.permute.xlu0 %123
      %v125 = vadd.f32 %v118, %v124
      %126 = vrot.lane.b32.xlu0 %v125, 16
      %v127 = vpop.permute.xlu0 %126
      %v128 = vadd.f32 %v125, %v127
      %129 = vrot.lane.b32.xlu0 %v128, 32
      %v130 = vpop.permute.xlu0 %129
      %v131 = vadd.f32 %v128, %v130
      %132 = vrot.lane.b32.xlu0 %v131, 64
      %v133 = vpop.permute.xlu0 %132
      %v134 = vadd.f32 %v131, %v133
      %v135 = vmul.f32 %v134, 0.0625
      %v136 = vperm.slane %v135, 0
      %v137 = vsub.f32 %v118, %v136
      %v138 = vsub.f32 %v119, %v136
      %v139 = vadd.f32 %v137, %v138
      %v140 = vrot.slane %v139, 4
      %v141 = vadd.f32 %v139, %v140
      %v142 = vrot.slane %v141, 2
      %v143 = vadd.f32 %v141, %v142
      %v144 = vrot.slane %v143, 1
      %v145 = vadd.f32 %v143, %v144
      %v146 = vmul.f32 %v137, %v137
      %v147 = vmul.f32 %v138, %v138
      %v148 = vadd.f32 %v146, %v147
      %v149 = vrot.slane %v148, 4
      %v150 = vadd.f32 %v148, %v149
      %v151 = vrot.slane %v150, 2
      %v152 = vadd.f32 %v150, %v151
      %v153 = vrot.slane %v152, 1
      %v154 = vadd.f32 %v152, %v153
      %155 = vrot.lane.b32.xlu0 %v145, 8
      %v156 = vpop.permute.xlu0 %155
      %v157 = vadd.f32 %v145, %v156
      %158 = vrot.lane.b32.xlu0 %v157, 16
      %v159 = vpop.permute.xlu0 %158
      %v160 = vadd.f32 %v157, %v159
      %161 = vrot.lane.b32.xlu0 %v160, 32
      %v162 = vpop.permute.xlu0 %161
      %v163 = vadd.f32 %v160, %v162
      %164 = vrot.lane.b32.xlu0 %v163, 64
      %v165 = vpop.permute.xlu0 %164
      %v166 = vadd.f32 %v163, %v165
      %167 = vrot.lane.b32.xlu0 %v154, 8
      %v168 = vpop.permute.xlu0 %167
      %v169 = vadd.f32 %v154, %v168
      %170 = vrot.lane.b32.xlu0 %v169, 16
      %v171 = vpop.permute.xlu0 %170
      %v172 = vadd.f32 %v169, %v171
      %173 = vrot.lane.b32.xlu0 %v172, 32
      %v174 = vpop.permute.xlu0 %173
      %v175 = vadd.f32 %v172, %v174
      %176 = vrot.lane.b32.xlu0 %v175, 64
      %v177 = vpop.permute.xlu0 %176
      %v178 = vadd.f32 %v175, %v177
      %v179 = vmul.f32 %v166, 0.00390625
      %v180 = vmul.f32 %v178, 0.00390625
      %v181 = vmul.f32 %v179, %v179
      %v182 = vsub.f32 %v180, %v181
      %v183 = vmax.f32 %v182, 0.0
      %v184 = vadd.f32 %v183, 1e-05
      %v185 = vrsqrt.pop %v184
      %v186 = vmul.f32 %v185, %v184
      %v187 = vmul.f32 %v186, %v185
      %v188 = vmul.f32 0.5, %v187
      %v189 = vsub.f32 1.5, %v188
      %v190 = vmul.f32 %v185, %v189
      %vm191 = vweird.f32 %v184
      %vm192 = vweird.f32 %v185
      %vm193 = vmor %vm191, %vm192
      %v194 = vsel %vm193, %v185, %v190
      %v195 = vmul.f32 %v122, %v194
      %v196 = vadd.f32 %v135, %v179
      %v197 = vmul.f32 %v196, %v195
      %v199 = vrot.slane %v197, 7
      %v201 = vsub.f32 %v122, %v199
      %v202 = vperm.slane %v195, 0
      %v203 = vmul.f32 %v118, %v202
      %v204 = vmul.f32 %v119, %v202
      %v205 = vperm.slane %v201, 1
      %v206 = vadd.f32 %v203, %v205
      %v207 = vadd.f32 %v204, %v205
      %v208 = vrot.slane %v206, 7
      %v209 = vrot.slane %v207, 7
      %v210 = vlaneseq
      %v211 = vshrl.u32 %v210, 7
      %vm212 = vcmp.lt.s32.totalorder %v211, 1
      %v213 = vsel %vm212, %v208, %v209
      %v214 = vsel %vm212, %v209, %v208
      %215 = vrot.lane.b32.xlu0 %v214, 8
      %v216 = vpop.permute.xlu0 %215
      %217 = vrot.lane.b32.xlu0 %v213, 8
      %v218 = vpop.permute.xlu0 %217
      %v219 = vperm.slane %v56, 0
      %v220 = vmul.f32 %v216, %v219
      %v221 = vmul.f32 %v218, %v219
      %v222 = vperm.slane %v56, 1
      %v223 = vmul.f32 %v214, %v222
      %v224 = vmul.f32 %v213, %v222
      %v225 = vadd.f32 %v220, %v223
      %v226 = vadd.f32 %v221, %v224
      %227 = vrot.lane.b32.xlu0 %v214, 120
      %v228 = vpop.permute.xlu0 %227
      %229 = vrot.lane.b32.xlu0 %v213, 120
      %v230 = vpop.permute.xlu0 %229
      %v231 = vperm.slane %v56, 2
      %v232 = vmul.f32 %v228, %v231
      %v233 = vmul.f32 %v230, %v231
      %v234 = vadd.f32 %v225, %v232
      %v235 = vadd.f32 %v226, %v233
      %236 = vrot.lane.b32.xlu0 %v206, 8
      %v237 = vpop.permute.xlu0 %236
      %238 = vrot.lane.b32.xlu0 %v207, 8
      %v239 = vpop.permute.xlu0 %238
      %v240 = vperm.slane %v56, 3
      %v241 = vmul.f32 %v237, %v240
      %v242 = vmul.f32 %v239, %v240
      %v243 = vadd.f32 %v234, %v241
      %v244 = vadd.f32 %v235, %v242
      %v245 = vperm.slane %v56, 4
      %v246 = vmul.f32 %v206, %v245
      %v247 = vmul.f32 %v207, %v245
      %v248 = vadd.f32 %v243, %v246
      %v249 = vadd.f32 %v244, %v247
      %250 = vrot.lane.b32.xlu0 %v206, 120
      %v251 = vpop.permute.xlu0 %250
      %252 = vrot.lane.b32.xlu0 %v207, 120
      %v253 = vpop.permute.xlu0 %252
      %v254 = vperm.slane %v56, 5
      %v255 = vmul.f32 %v251, %v254
      %v256 = vmul.f32 %v253, %v254
      %v257 = vadd.f32 %v248, %v255
      %v258 = vadd.f32 %v249, %v256
      %v259 = vrot.slane %v206, 1
      %v260 = vrot.slane %v207, 1
      %vm261 = vcmp.lt.s32.totalorder %v211, 7
      %v262 = vsel %vm261, %v259, %v260
      %v263 = vsel %vm261, %v260, %v259
      %264 = vrot.lane.b32.xlu0 %v262, 8
      %v265 = vpop.permute.xlu0 %264
      %266 = vrot.lane.b32.xlu0 %v263, 8
      %v267 = vpop.permute.xlu0 %266
      %v268 = vperm.slane %v56, 6
      %v269 = vmul.f32 %v265, %v268
      %v270 = vmul.f32 %v267, %v268
      %v271 = vadd.f32 %v257, %v269
      %v272 = vadd.f32 %v258, %v270
      %v273 = vperm.slane %v56, 7
      %v274 = vmul.f32 %v262, %v273
      %v275 = vmul.f32 %v263, %v273
      %v276 = vadd.f32 %v271, %v274
      %v277 = vadd.f32 %v272, %v275
      %278 = vrot.lane.b32.xlu0 %v262, 120
      %v279 = vpop.permute.xlu0 %278
      %280 = vrot.lane.b32.xlu0 %v263, 120
      %v281 = vpop.permute.xlu0 %280
      %v282 = vperm.slane %v57, 0
      %v283 = vmul.f32 %v279, %v282
      %v284 = vmul.f32 %v281, %v282
      %v285 = vadd.f32 %v276, %v283
      %v286 = vadd.f32 %v277, %v284
      %v287 = vperm.slane %v57, 1
      %v288 = vadd.f32 %v285, %v287
      %v289 = vadd.f32 %v286, %v287
      %v290 = vrot.slane %v288, 7
      %v291 = vrot.slane %v289, 7
      %v292 = vsel %vm212, %v290, %v291
      %v293 = vsel %vm212, %v291, %v290
      %294 = vrot.lane.b32.xlu0 %v293, 8
      %v295 = vpop.permute.xlu0 %294
      %296 = vrot.lane.b32.xlu0 %v292, 8
      %v297 = vpop.permute.xlu0 %296
      %v298 = vperm.slane %v58, 0
      %v299 = vmul.f32 %v295, %v298
      %v300 = vmul.f32 %v297, %v298
      %v301 = vperm.slane %v58, 1
      %v302 = vmul.f32 %v293, %v301
      %v303 = vmul.f32 %v292, %v301
      %v304 = vadd.f32 %v299, %v302
      %v305 = vadd.f32 %v300, %v303
      %306 = vrot.lane.b32.xlu0 %v293, 120
      %v307 = vpop.permute.xlu0 %306
      %308 = vrot.lane.b32.xlu0 %v292, 120
      %v309 = vpop.permute.xlu0 %308
      %v310 = vperm.slane %v58, 2
      %v311 = vmul.f32 %v307, %v310
      %v312 = vmul.f32 %v309, %v310
      %v313 = vadd.f32 %v304, %v311
      %v314 = vadd.f32 %v305, %v312
      %315 = vrot.lane.b32.xlu0 %v288, 8
      %v316 = vpop.permute.xlu0 %315
      %317 = vrot.lane.b32.xlu0 %v289, 8
      %v318 = vpop.permute.xlu0 %317
      %v319 = vperm.slane %v58, 3
      %v320 = vmul.f32 %v316, %v319
      %v321 = vmul.f32 %v318, %v319
      %v322 = vadd.f32 %v313, %v320
      %v323 = vadd.f32 %v314, %v321
      %v324 = vperm.slane %v58, 4
      %v325 = vmul.f32 %v288, %v324
      %v326 = vmul.f32 %v289, %v324
      %v327 = vadd.f32 %v322, %v325
      %v328 = vadd.f32 %v323, %v326
      %329 = vrot.lane.b32.xlu0 %v288, 120
      %v330 = vpop.permute.xlu0 %329
      %331 = vrot.lane.b32.xlu0 %v289, 120
      %v332 = vpop.permute.xlu0 %331
      %v333 = vperm.slane %v58, 5
      %v334 = vmul.f32 %v330, %v333
      %v335 = vmul.f32 %v332, %v333
      %v336 = vadd.f32 %v327, %v334
      %v337 = vadd.f32 %v328, %v335
      %v338 = vrot.slane %v288, 1
      %v339 = vrot.slane %v289, 1
      %v340 = vsel %vm261, %v338, %v339
      %v341 = vsel %vm261, %v339, %v338
      %342 = vrot.lane.b32.xlu0 %v340, 8
      %v343 = vpop.permute.xlu0 %342
      %344 = vrot.lane.b32.xlu0 %v341, 8
      %v345 = vpop.permute.xlu0 %344
      %v346 = vperm.slane %v58, 6
      %v347 = vmul.f32 %v343, %v346
      %v348 = vmul.f32 %v345, %v346
      %v349 = vadd.f32 %v336, %v347
      %v350 = vadd.f32 %v337, %v348
      %v351 = vperm.slane %v58, 7
      %v352 = vmul.f32 %v340, %v351
      %v353 = vmul.f32 %v341, %v351
      %v354 = vadd.f32 %v349, %v352
      %v355 = vadd.f32 %v350, %v353
      %356 = vrot.lane.b32.xlu0 %v340, 120
      %v357 = vpop.permute.xlu0 %356
      %358 = vrot.lane.b32.xlu0 %v341, 120
      %v359 = vpop.permute.xlu0 %358
      %v360 = vperm.slane %v59, 0
      %v361 = vmul.f32 %v357, %v360
      %v362 = vmul.f32 %v359, %v360
      %v363 = vadd.f32 %v354, %v361
      %v364 = vadd.f32 %v355, %v362
      %v365 = vperm.slane %v59, 1
      %v366 = vadd.f32 %v363, %v365
      %v367 = vadd.f32 %v364, %v365
      %v368 = vadd.f32 %v118, %v366
      %v369 = vadd.f32 %v119, %v367
      %s370 = scalar_lea.vmem [#allocation7], %s116
      %371 = vst [vmem:[%s370] sm:$0xff] %v368
      %372 = vst [vmem:[%s370 + $0x8] sm:$0xff] %v369
      %373 = vrot.lane.b32.xlu0 %v368, 8
      %v374 = vpop.permute.xlu0 %373
      %v375 = vadd.f32 %v368, %v374
      %376 = vrot.lane.b32.xlu0 %v375, 16
      %v377 = vpop.permute.xlu0 %376
      %v378 = vadd.f32 %v375, %v377
      %379 = vrot.lane.b32.xlu0 %v378, 32
      %v380 = vpop.permute.xlu0 %379
      %v381 = vadd.f32 %v378, %v380
      %382 = vrot.lane.b32.xlu0 %v381, 64
      %v383 = vpop.permute.xlu0 %382
      %v384 = vadd.f32 %v381, %v383
      %v385 = vmul.f32 %v384, 0.0625
      %v386 = vperm.slane %v385, 0
      %v387 = vsub.f32 %v368, %v386
      %v388 = vsub.f32 %v369, %v386
      %v389 = vadd.f32 %v387, %v388
      %v390 = vrot.slane %v389, 4
      %v391 = vadd.f32 %v389, %v390
      %v392 = vrot.slane %v391, 2
      %v393 = vadd.f32 %v391, %v392
      %v394 = vrot.slane %v393, 1
      %v395 = vadd.f32 %v393, %v394
      %v396 = vmul.f32 %v387, %v387
      %v397 = vmul.f32 %v388, %v388
      %v398 = vadd.f32 %v396, %v397
      %v399 = vrot.slane %v398, 4
      %v400 = vadd.f32 %v398, %v399
      %v401 = vrot.slane %v400, 2
      %v402 = vadd.f32 %v400, %v401
      %v403 = vrot.slane %v402, 1
      %v404 = vadd.f32 %v402, %v403
      %405 = vrot.lane.b32.xlu0 %v395, 8
      %v406 = vpop.permute.xlu0 %405
      %v407 = vadd.f32 %v395, %v406
      %408 = vrot.lane.b32.xlu0 %v407, 16
      %v409 = vpop.permute.xlu0 %408
      %v410 = vadd.f32 %v407, %v409
      %411 = vrot.lane.b32.xlu0 %v410, 32
      %v412 = vpop.permute.xlu0 %411
      %v413 = vadd.f32 %v410, %v412
      %414 = vrot.lane.b32.xlu0 %v413, 64
      %v415 = vpop.permute.xlu0 %414
      %v416 = vadd.f32 %v413, %v415
      %417 = vrot.lane.b32.xlu0 %v404, 8
      %v418 = vpop.permute.xlu0 %417
      %v419 = vadd.f32 %v404, %v418
      %420 = vrot.lane.b32.xlu0 %v419, 16
      %v421 = vpop.permute.xlu0 %420
      %v422 = vadd.f32 %v419, %v421
      %423 = vrot.lane.b32.xlu0 %v422, 32
      %v424 = vpop.permute.xlu0 %423
      %v425 = vadd.f32 %v422, %v424
      %426 = vrot.lane.b32.xlu0 %v425, 64
      %v427 = vpop.permute.xlu0 %426
      %v428 = vadd.f32 %v425, %v427
      %v429 = vmul.f32 %v416, 0.00390625
      %v430 = vmul.f32 %v428, 0.00390625
      %v431 = vmul.f32 %v429, %v429
      %v432 = vsub.f32 %v430, %v431
      %v433 = vmax.f32 %v432, 0.0
      %v434 = vadd.f32 %v433, 1e-05
      %v435 = vrsqrt.pop %v434
      %v436 = vmul.f32 %v435, %v434
      %v437 = vmul.f32 %v436, %v435
      %v438 = vmul.f32 0.5, %v437
      %v439 = vsub.f32 1.5, %v438
      %v440 = vmul.f32 %v435, %v439
      %vm441 = vweird.f32 %v434
      %vm442 = vweird.f32 %v435
      %vm443 = vmor %vm441, %vm442
      %v444 = vsel %vm443, %v435, %v440
      %v446 = vrot.slane %v444, 6
      %v448 = vmul.f32 %v122, %v446
      %v449 = vadd.f32 %v385, %v429
      %v451 = vrot.slane %v448, 2
      %v453 = vmul.f32 %v449, %v451
      %v455 = vrot.slane %v453, 5
      %v457 = vsub.f32 %v122, %v455
      %s458 = sadd.s32 0, %s116
      %s459 = scalar_lea.vmem [#allocation7], %s458
      %v460 = vld [vmem:[%s459] sm:$0xff]
      %v461 = vld [vmem:[%s459 + $0x8] sm:$0xff]
      %v462 = vperm.slane %v448, 2
      %v463 = vmul.f32 %v460, %v462
      %v464 = vmul.f32 %v461, %v462
      %v465 = vperm.slane %v457, 3
      %v466 = vadd.f32 %v463, %v465
      %v467 = vadd.f32 %v464, %v465
      %v468 = vpack.c.bf16 %v467, %v466
      %v470 = vperm.slane %v108, 0
      %v471 = vperm.slane %v108, 1
      %v490 = vunpack.c.l.b16 %v60
      %v491 = vunpack.c.h.b16 %v60
      %v492 = vunpack.c.l.b16 %v61
      %v493 = vunpack.c.h.b16 %v61
      %v494 = vunpack.c.l.b16 %v62
      %v495 = vunpack.c.h.b16 %v62
      %v496 = vunpack.c.l.b16 %v63
      %v497 = vunpack.c.h.b16 %v63
      %v498 = vunpack.c.l.b16 %v64
      %v499 = vunpack.c.h.b16 %v64
      %v500 = vunpack.c.l.b16 %v65
      %v501 = vunpack.c.h.b16 %v65
      %v502 = vunpack.c.l.b16 %v66
      %v503 = vunpack.c.h.b16 %v66
      %v504 = vunpack.c.l.b16 %v67
      %v505 = vunpack.c.h.b16 %v67
      %v506 = vunpack.c.l.b16 %v68
      %v507 = vunpack.c.h.b16 %v68
      %v508 = vunpack.c.l.b16 %v69
      %v509 = vunpack.c.h.b16 %v69
      %v510 = vunpack.c.l.b16 %v70
      %v511 = vunpack.c.h.b16 %v70
      %v512 = vunpack.c.l.b16 %v71
      %v513 = vunpack.c.h.b16 %v71
      %v514 = vunpack.c.l.b16 %v72
      %v515 = vunpack.c.h.b16 %v72
      %v516 = vunpack.c.l.b16 %v73
      %v517 = vunpack.c.h.b16 %v73
      %v518 = vunpack.c.l.b16 %v74
      %v519 = vunpack.c.h.b16 %v74
      %v520 = vunpack.c.l.b16 %v75
      %v521 = vunpack.c.h.b16 %v75
      %v522 = vpack.c.b16 %v492, %v490
      %v523 = vpack.c.b16 %v493, %v491
      %v524 = vpack.c.b16 %v496, %v494
      %v525 = vpack.c.b16 %v497, %v495
      %v526 = vpack.c.b16 %v500, %v498
      %v527 = vpack.c.b16 %v501, %v499
      %v528 = vpack.c.b16 %v504, %v502
      %v529 = vpack.c.b16 %v505, %v503
      %v530 = vpack.c.b16 %v508, %v506
      %v531 = vpack.c.b16 %v509, %v507
      %v532 = vpack.c.b16 %v512, %v510
      %v533 = vpack.c.b16 %v513, %v511
      %v534 = vpack.c.b16 %v516, %v514
      %v535 = vpack.c.b16 %v517, %v515
      %v536 = vpack.c.b16 %v520, %v518
      %v537 = vpack.c.b16 %v521, %v519
      %554 = vmatpush.bf16.msra.mxu0 %v536
      %555 = vmatpush.bf16.msra.mxu0 %v534
      %556 = vmatpush.bf16.msra.mxu0 %v532
      %557 = vmatpush.bf16.msra.mxu0 %v530
      %558 = vmatpush.bf16.msra.mxu0 %v528
      %559 = vmatpush.bf16.msra.mxu0 %v526
      %560 = vmatpush.bf16.msra.mxu0 %v524
      %561 = vmatpush.bf16.msra.mxu0 %v522
      %562 = vmatmul.bf16.gmra.mxu0 %v468
      %v563 = vpop.f32.mrf.mxu0
      %v564 = vadd.f32 %v470, %v563
      %v565 = vpop.f32.mrf.mxu0
      %v566 = vadd.f32 %v470, %v565
      %567 = vdwg.mxu0
      %568 = vmatpush.bf16.msra.mxu0 %v537
      %569 = vmatpush.bf16.msra.mxu0 %v535
      %570 = vmatpush.bf16.msra.mxu0 %v533
      %571 = vmatpush.bf16.msra.mxu0 %v531
      %572 = vmatpush.bf16.msra.mxu0 %v529
      %573 = vmatpush.bf16.msra.mxu0 %v527
      %574 = vmatpush.bf16.msra.mxu0 %v525
      %575 = vmatpush.bf16.msra.mxu0 %v523
      %576 = vmatmul.bf16.gmra.mxu0 %v468
      %v577 = vpop.f32.mrf.mxu0
      %v578 = vadd.f32 %v471, %v577
      %v579 = vpop.f32.mrf.mxu0
      %v580 = vadd.f32 %v471, %v579
      %581 = vdwg.mxu0
      %v582 = vmul.f32 %v564, 0.5
      %v583 = vmul.f32 %v578, 0.5
      %v584 = vmul.f32 %v566, 0.5
      %v585 = vmul.f32 %v580, 0.5
      %v586 = vmul.f32 %v564, 0.044715
      %v587 = vmul.f32 %v578, 0.044715
      %v588 = vmul.f32 %v566, 0.044715
      %v589 = vmul.f32 %v580, 0.044715
      %v590 = vmul.f32 %v586, %v564
      %v591 = vmul.f32 %v587, %v578
      %v592 = vmul.f32 %v588, %v566
      %v593 = vmul.f32 %v589, %v580
      %v594 = vmul.f32 %v590, %v564
      %v595 = vmul.f32 %v591, %v578
      %v596 = vmul.f32 %v592, %v566
      %v597 = vmul.f32 %v593, %v580
      %v598 = vadd.f32 %v564, %v594
      %v599 = vadd.f32 %v578, %v595
      %v600 = vadd.f32 %v566, %v596
      %v601 = vadd.f32 %v580, %v597
      %v602 = vmul.f32 %v598, 0.7978846
      %v603 = vmul.f32 %v599, 0.7978846
      %v604 = vmul.f32 %v600, 0.7978846
      %v605 = vmul.f32 %v601, 0.7978846
      %v606 = vtanh.pop %v602
      %v607 = vtanh.pop %v603
      %v608 = vtanh.pop %v604
      %v609 = vtanh.pop %v605
      %v610 = vadd.f32 %v606, 1.0
      %v611 = vadd.f32 %v607, 1.0
      %v612 = vadd.f32 %v608, 1.0
      %v613 = vadd.f32 %v609, 1.0
      %v614 = vmul.f32 %v582, %v610
      %v615 = vmul.f32 %v583, %v611
      %v616 = vmul.f32 %v584, %v612
      %v617 = vmul.f32 %v585, %v613
      %v618 = vpack.c.bf16 %v616, %v614
      %v619 = vpack.c.bf16 %v617, %v615
      %v620 = vperm.slane %v109, 0
      %v653 = vunpack.c.l.b16 %v76
      %v654 = vunpack.c.l.b16 %v77
      %v655 = vunpack.c.l.b16 %v78
      %v656 = vunpack.c.l.b16 %v79
      %v657 = vunpack.c.l.b16 %v80
      %v658 = vunpack.c.l.b16 %v81
      %v659 = vunpack.c.l.b16 %v82
      %v660 = vunpack.c.l.b16 %v83
      %v661 = vunpack.c.l.b16 %v84
      %v662 = vunpack.c.l.b16 %v85
      %v663 = vunpack.c.l.b16 %v86
      %v664 = vunpack.c.l.b16 %v87
      %v665 = vunpack.c.l.b16 %v88
      %v666 = vunpack.c.l.b16 %v89
      %v667 = vunpack.c.l.b16 %v90
      %v668 = vunpack.c.l.b16 %v91
      %v669 = vunpack.c.l.b16 %v92
      %v670 = vunpack.c.l.b16 %v93
      %v671 = vunpack.c.l.b16 %v94
      %v672 = vunpack.c.l.b16 %v95
      %v673 = vunpack.c.l.b16 %v96
      %v674 = vunpack.c.l.b16 %v97
      %v675 = vunpack.c.l.b16 %v98
      %v676 = vunpack.c.l.b16 %v99
      %v677 = vunpack.c.l.b16 %v100
      %v678 = vunpack.c.l.b16 %v101
      %v679 = vunpack.c.l.b16 %v102
      %v680 = vunpack.c.l.b16 %v103
      %v681 = vunpack.c.l.b16 %v104
      %v682 = vunpack.c.l.b16 %v105
      %v683 = vunpack.c.l.b16 %v106
      %v684 = vunpack.c.l.b16 %v107
      %v685 = vpack.c.b16 %v654, %v653
      %v686 = vpack.c.b16 %v656, %v655
      %v687 = vpack.c.b16 %v658, %v657
      %v688 = vpack.c.b16 %v660, %v659
      %v689 = vpack.c.b16 %v662, %v661
      %v690 = vpack.c.b16 %v664, %v663
      %v691 = vpack.c.b16 %v666, %v665
      %v692 = vpack.c.b16 %v668, %v667
      %v693 = vpack.c.b16 %v670, %v669
      %v694 = vpack.c.b16 %v672, %v671
      %v695 = vpack.c.b16 %v674, %v673
      %v696 = vpack.c.b16 %v676, %v675
      %v697 = vpack.c.b16 %v678, %v677
      %v698 = vpack.c.b16 %v680, %v679
      %v699 = vpack.c.b16 %v682, %v681
      %v700 = vpack.c.b16 %v684, %v683
      %717 = vmatpush.bf16.msra.mxu0 %v692
      %718 = vmatpush.bf16.msra.mxu0 %v691
      %719 = vmatpush.bf16.msra.mxu0 %v690
      %720 = vmatpush.bf16.msra.mxu0 %v689
      %721 = vmatpush.bf16.msra.mxu0 %v688
      %722 = vmatpush.bf16.msra.mxu0 %v687
      %723 = vmatpush.bf16.msra.mxu0 %v686
      %724 = vmatpush.bf16.msra.mxu0 %v685
      %725 = vmatmul.bf16.gmra.mxu0 %v618
      %v726 = vpop.f32.mrf.mxu0
      %v727 = vadd.f32 %v620, %v726
      %v728 = vpop.f32.mrf.mxu0
      %v729 = vadd.f32 %v620, %v728
      %730 = vdwg.mxu0
      %731 = vmatpush.bf16.msra.mxu0 %v700
      %732 = vmatpush.bf16.msra.mxu0 %v699
      %733 = vmatpush.bf16.msra.mxu0 %v698
      %734 = vmatpush.bf16.msra.mxu0 %v697
      %735 = vmatpush.bf16.msra.mxu0 %v696
      %736 = vmatpush.bf16.msra.mxu0 %v695
      %737 = vmatpush.bf16.msra.mxu0 %v694
      %738 = vmatpush.bf16.msra.mxu0 %v693
      %739 = vmatmul.bf16.gmra.mxu0 %v619
      %v740 = vpop.f32.mrf.mxu0
      %v741 = vadd.f32 %v727, %v740
      %v742 = vpop.f32.mrf.mxu0
      %v743 = vadd.f32 %v729, %v742
      %744 = vdwg.mxu0
      %v745 = vadd.f32 %v460, %v741
      %v746 = vadd.f32 %v461, %v743
      %747 = vst [vmem:[%s459] sm:$0xff] %v745
      %748 = vst [vmem:[%s459 + $0x8] sm:$0xff] %v746
    $region38: #{tpu_custom_call.1} parent=1 // loop_footer
      %s115 = sadd.s32 1, %s111
    $region39: #{tpu_custom_call.1} parent=1 // loop_footer_branch
      %110 = sbr.rel target = $region35
    $region40: #{tpu_custom_call.1} parent=1 // loop_exit
      _
    // Predicated region
    $region41: #{tpu_custom_call.1} parent=1 // pred_check
      _
    $region42: #{tpu_custom_call.1} parent=1 // pred_check_branch
      %750 = sbr.rel (0) target = $region44
    $region43: #{tpu_custom_call.1} parent=1 // pred_region
      %752 = vsyncadd [#allocation4], 0
      %s753 = sshll.u32 [#allocation7], 4
      %s754 = int_to_ptr.vmem [resolvable:$true] %s753
      %s755 = sshll.u32 %s6, 4
      %s756 = int_to_ptr.hbm [resolvable:$true] %s755
      %761 = dma.vmem_to_hbm [thread:$0]  %s754, 512, %s756, [#allocation4], 128, 128, 8
    $region44: #{tpu_custom_call.1} parent=1 // pred_fallthru
      _
    // Predicated region
    $region45: #{tpu_custom_call.1} parent=1 // pred_check
      _
    $region46: #{tpu_custom_call.1} parent=1 // pred_check_branch
      %763 = sbr.rel (0) target = $region48
    $region47: #{tpu_custom_call.1} parent=1 // pred_region
      %765 = dma.done [#allocation4], 512
    $region48: #{tpu_custom_call.1} parent=1 // pred_fallthru
      _
    %766 = vsyncpa [#allocation3], 1
    %767 = vsyncpa [#allocation6], 1
    %768 = vsyncpa [#allocation4], 1

</llo_original>
